<compile_context>
chip_gen: v5e
topology: v5e:2x2
jax: 0.10.0
libtpu: 0.0.40
codegen_flags: <defaults>
</compile_context>

<pallas_src>
import functools

import jax
import jax.numpy as jnp
from jax.experimental import pallas as pl
from jax.experimental.pallas import tpu as pltpu


def _round_up(n, m):
    return (n + m - 1) // m * m


def _pick_q_tile(S):
    if S <= 512:
        return S
    for t in (512, 256, 128, 64, 32, 16, 8):
        if S % t == 0:
            return t
    return S


def scaling_layer_kernel(
    xq_ref, xf_ref,
    wq_ref, bq_ref, wk_ref, bk_ref, wv_ref, bv_ref, wo_ref, bo_ref,
    ln1g_ref, ln1b_ref,
    w1_ref, b1_ref, w2_ref, b2_ref, wr_ref, br_ref,
    ln2g_ref, ln2b_ref,
    o_ref,
    *, heads, d_out, eps=1e-5,
):
    H = heads
    _, TQ, Din = xq_ref.shape
    S = xf_ref.shape[1]
    dh = Din // H
    scale = 1.0 / float(dh) ** 0.5

    xq_f32 = xq_ref[0].astype(jnp.float32)          # (TQ, Din) — also the residual
    xq = xq_f32.astype(jnp.bfloat16)                # MXU operand
    xf = xf_ref[0].astype(jnp.bfloat16)             # (S, Din) full sequence for K/V

    # ---- Multi-head self attention (in -> in) ----
    # Statically unrolled head loop of 2-D MXU dots; x is read in place (no
    # (H, N, Din) broadcast) and the head reduction of the output projection is
    # accumulated directly into `mh` (no (H, N, Din) intermediate + sum).
    mh = jnp.zeros((TQ, Din), jnp.float32)
    for h in range(H):
        q_h = (jnp.dot(xq, wq_ref[h], preferred_element_type=jnp.float32)
               + bq_ref[h]) * scale                 # scale folded into q, not s
        k_h = jnp.dot(xf, wk_ref[h], preferred_element_type=jnp.float32) + bk_ref[h]
        v_h = jnp.dot(xf, wv_ref[h], preferred_element_type=jnp.float32) + bv_ref[h]

        s = jnp.einsum("qd,kd->qk",
                       q_h.astype(jnp.bfloat16), k_h.astype(jnp.bfloat16),
                       preferred_element_type=jnp.float32)        # (TQ, S)
        s = s - jnp.max(s, axis=-1, keepdims=True)
        p = jnp.exp(s)
        p = p * pl.reciprocal(jnp.sum(p, axis=-1, keepdims=True), approx=True)

        o_h = jnp.dot(p.astype(jnp.bfloat16), v_h.astype(jnp.bfloat16),
                      preferred_element_type=jnp.float32)         # (TQ, dh)
        mh = mh + jnp.dot(o_h.astype(jnp.bfloat16), wo_ref[h],
                          preferred_element_type=jnp.float32)     # accumulate over heads
    mh = mh + bo_ref[...]

    # ---- residual + multihead LayerNorm (over true Din) ----
    z1 = mh + xq_f32
    mu1 = jnp.mean(z1, axis=-1, keepdims=True)
    zc1 = z1 - mu1
    var1 = jnp.mean(zc1 * zc1, axis=-1, keepdims=True)
    h1 = zc1 * jax.lax.rsqrt(var1 + eps) * ln1g_ref[...] + ln1b_ref[...]

    # ---- PWFF (in -> inner -> out_pad) + residual scaling (in -> out_pad) ----
    h1b = h1.astype(jnp.bfloat16)
    ff = jnp.dot(h1b, w1_ref[...], preferred_element_type=jnp.float32) + b1_ref[...]
    ff = jnp.maximum(ff, 0.0)
    ff = jnp.dot(ff.astype(jnp.bfloat16), w2_ref[...],
                 preferred_element_type=jnp.float32) + b2_ref[...]
    res = jnp.dot(h1b, wr_ref[...], preferred_element_type=jnp.float32) + br_ref[...]

    # ---- pwff LayerNorm over the *true* d_out features (lane-padded dim) ----
    z2 = ff + res                                   # padding columns are exactly 0
    Dp = z2.shape[-1]
    mask = (jax.lax.broadcasted_iota(jnp.int32, (1, Dp), 1) < d_out).astype(jnp.float32)
    inv_d = 1.0 / float(d_out)
    mu2 = jnp.sum(z2, axis=-1, keepdims=True) * inv_d
    zc2 = (z2 - mu2) * mask
    var2 = jnp.sum(zc2 * zc2, axis=-1, keepdims=True) * inv_d
    out = zc2 * jax.lax.rsqrt(var2 + eps) * ln2g_ref[...] + ln2b_ref[...]

    o_ref[0] = out.astype(o_ref.dtype)


_WEIGHT_ORDER = ("wq", "bq", "wk", "bk", "wv", "bv", "wo", "bo",
                 "ln1g", "ln1b", "w1", "b1", "w2", "b2", "wr", "br",
                 "ln2g", "ln2b")


def prepare_params(params, *, heads, lane=128):
    """One-time weight preprocessing (per-head split, bf16 cast, lane padding).

    Hoisted out of the per-call path so the forward pass never re-reads /
    re-writes weights in HBM just to repack them.
    """
    Din = params["wq"].shape[0]
    H = heads
    dh = Din // H
    Dout = params["wr"].shape[1]
    Dp = _round_up(Dout, lane)
    bf16 = jnp.bfloat16
    f32 = jnp.float32

    def pad_last(a, width):
        return jnp.pad(a, [(0, 0)] * (a.ndim - 1) + [(0, width - a.shape[-1])])

    prepped = dict(
        wq=params["wq"].reshape(Din, H, dh).transpose(1, 0, 2).astype(bf16),
        wk=params["wk"].reshape(Din, H, dh).transpose(1, 0, 2).astype(bf16),
        wv=params["wv"].reshape(Din, H, dh).transpose(1, 0, 2).astype(bf16),
        bq=params["bq"].reshape(H, 1, dh).astype(f32),
        bk=params["bk"].reshape(H, 1, dh).astype(f32),
        bv=params["bv"].reshape(H, 1, dh).astype(f32),
        wo=params["wo"].reshape(H, dh, Din).astype(bf16),
        bo=params["bo"].astype(f32),
        ln1g=params["ln1g"].astype(f32),
        ln1b=params["ln1b"].astype(f32),
        w1=params["w1"].astype(bf16),
        b1=params["b1"].astype(f32),
        w2=pad_last(params["w2"], Dp).astype(bf16),
        b2=pad_last(params["b2"], Dp).astype(f32),
        wr=pad_last(params["wr"], Dp).astype(bf16),
        br=pad_last(params["br"], Dp).astype(f32),
        ln2g=pad_last(params["ln2g"], Dp).astype(f32),
        ln2b=pad_last(params["ln2b"], Dp).astype(f32),
    )
    meta = dict(heads=H, d_out=Dout, d_pad=Dp)
    return prepped, meta


def scaling_layer_forward(x, prepped, *, heads, d_out, d_pad, q_tile=None,
                          vmem_limit_bytes=48 * 1024 * 1024,
                          return_padded=False):
    B, S, Din = x.shape
    H = heads
    assert Din % H == 0, "in_features must be divisible by heads"
    TQ = q_tile or _pick_q_tile(S)
    assert S % TQ == 0, "sequence length must be divisible by the query tile"
    NQ = S // TQ
    Dp = d_pad

    weights = [prepped[k] for k in _WEIGHT_ORDER]

    def resident(a):
        nd = a.ndim
        return pl.BlockSpec(a.shape, lambda b, qi, _nd=nd: (0,) * _nd)

    in_specs = (
        [pl.BlockSpec((1, TQ, Din), lambda b, qi: (b, qi, 0)),   # query/residual tile
         pl.BlockSpec((1, S, Din), lambda b, qi: (b, 0, 0))]     # full seq for K/V
        + [resident(a) for a in weights]
    )

    kernel = functools.partial(scaling_layer_kernel, heads=H, d_out=d_out)

    out_p = pl.pallas_call(
        kernel,
        out_shape=jax.ShapeDtypeStruct((B, S, Dp), x.dtype),
        grid_spec=pltpu.PrefetchScalarGridSpec(
            num_scalar_prefetch=0,
            grid=(B, NQ),
            in_specs=in_specs,
            out_specs=pl.BlockSpec((1, TQ, Dp), lambda b, qi: (b, qi, 0)),
        ),
        compiler_params=pltpu.CompilerParams(
            dimension_semantics=("parallel", "parallel"),
            # 48 MiB is safe for v7x (64 MiB physical); raise to ~96 MiB on
            # v5e/v6e (128 MiB physical) when using larger tiles.
            vmem_limit_bytes=vmem_limit_bytes,
        ),
    )(x, x, *weights)

    if return_padded:
        return out_p          # lane-dense (B, S, Dp) — preferred if the consumer can un-pad lazily
    return out_p[..., :d_out]


def init_params(key, in_features, out_features, inner_features):
    def linear(k, fin, fout):
        kw, kb = jax.random.split(k)
        bound = 1.0 / jnp.sqrt(fin)
        w = jax.random.uniform(kw, (fin, fout), jnp.float32, -bound, bound)
        b = jax.random.uniform(kb, (1, fout), jnp.float32, -bound, bound)
        return w, b

    ks = jax.random.split(key, 7)
    wq, bq = linear(ks[0], in_features, in_features)
    wk, bk = linear(ks[1], in_features, in_features)
    wv, bv = linear(ks[2], in_features, in_features)
    wo, bo = linear(ks[3], in_features, in_features)
    w1, b1 = linear(ks[4], in_features, inner_features)
    w2, b2 = linear(ks[5], inner_features, out_features)
    wr, br = linear(ks[6], in_features, out_features)
    return dict(
        wq=wq, bq=bq, wk=wk, bk=bk, wv=wv, bv=bv, wo=wo, bo=bo,
        ln1g=jnp.ones((1, in_features), jnp.float32),
        ln1b=jnp.zeros((1, in_features), jnp.float32),
        w1=w1, b1=b1, w2=w2, b2=b2,
        wr=wr, br=br,
        ln2g=jnp.ones((1, out_features), jnp.float32),
        ln2b=jnp.zeros((1, out_features), jnp.float32),
    )


def reference_forward(x, p, *, heads):
    # pure-JAX f32 reference matching the PyTorch module (eval mode)
    B, S, Din = x.shape
    dh = Din // heads

    def ln(z, g, b):
        mu = z.mean(-1, keepdims=True)
        var = ((z - mu) ** 2).mean(-1, keepdims=True)
        return (z - mu) / jnp.sqrt(var + 1e-5) * g + b

    q = x @ p["wq"] + p["bq"]
    k = x @ p["wk"] + p["bk"]
    v = x @ p["wv"] + p["bv"]
    q = q.reshape(B, S, heads, dh).transpose(0, 2, 1, 3)
    k = k.reshape(B, S, heads, dh).transpose(0, 2, 1, 3)
    v = v.reshape(B, S, heads, dh).transpose(0, 2, 1, 3)
    s = jnp.einsum("bhqd,bhkd->bhqk", q, k) / jnp.sqrt(dh)
    a = jax.nn.softmax(s, axis=-1)
    mh = jnp.einsum("bhqk,bhkd->bhqd", a, v).transpose(0, 2, 1, 3).reshape(B, S, Din)
    mh = mh @ p["wo"] + p["bo"]
    h1 = ln(mh + x, p["ln1g"], p["ln1b"])
    ff = jax.nn.relu(h1 @ p["w1"] + p["b1"]) @ p["w2"] + p["b2"]
    res = h1 @ p["wr"] + p["br"]
    return ln(ff + res, p["ln2g"], p["ln2b"])


if __name__ == "__main__":
    B, S = 2, 8
    in_features, out_features, inner_features, heads = 32, 48, 64, 4

    key = jax.random.PRNGKey(0)
    kx, kp = jax.random.split(key)
    x = jax.random.normal(kx, (B, S, in_features), jnp.float32)
    params = init_params(kp, in_features, out_features, inner_features)

    # Weight preprocessing hoisted out of the per-call path (done once).
    prepped, meta = prepare_params(params, heads=heads)
    prepped = jax.block_until_ready(prepped)

    fwd = jax.jit(functools.partial(
        scaling_layer_forward, heads=heads,
        d_out=meta["d_out"], d_pad=meta["d_pad"]))
    out = fwd(x, prepped)
    out = jax.block_until_ready(out)

    ref = reference_forward(x, params, heads=heads)
    assert out.shape == (B, S, out_features)
    # Tolerance covers bf16 MXU inputs (f32 accumulation) + approx reciprocal.
    err = float(jnp.max(jnp.abs(out - ref)))
    assert err < 5e-2, f"mismatch vs JAX reference, max abs err {err}"

    print("KERNEL_OK")
</pallas_src>

<mosaic_0001>
module attributes {stable_mosaic.version = 11 : i64} {
  func.func @scaling_layer_kernel(%arg0: i32, %arg1: i32, %arg2: memref<1x8x32xf32, #tpu.memory_space<vmem>>, %arg3: memref<1x8x32xf32, #tpu.memory_space<vmem>>, %arg4: memref<4x32x8xbf16, #tpu.memory_space<vmem>>, %arg5: memref<4x1x8xf32, #tpu.memory_space<vmem>>, %arg6: memref<4x32x8xbf16, #tpu.memory_space<vmem>>, %arg7: memref<4x1x8xf32, #tpu.memory_space<vmem>>, %arg8: memref<4x32x8xbf16, #tpu.memory_space<vmem>>, %arg9: memref<4x1x8xf32, #tpu.memory_space<vmem>>, %arg10: memref<4x8x32xbf16, #tpu.memory_space<vmem>>, %arg11: memref<1x32xf32, #tpu.memory_space<vmem>>, %arg12: memref<1x32xf32, #tpu.memory_space<vmem>>, %arg13: memref<1x32xf32, #tpu.memory_space<vmem>>, %arg14: memref<32x64xbf16, #tpu.memory_space<vmem>>, %arg15: memref<1x64xf32, #tpu.memory_space<vmem>>, %arg16: memref<64x128xbf16, #tpu.memory_space<vmem>>, %arg17: memref<1x128xf32, #tpu.memory_space<vmem>>, %arg18: memref<32x128xbf16, #tpu.memory_space<vmem>>, %arg19: memref<1x128xf32, #tpu.memory_space<vmem>>, %arg20: memref<1x128xf32, #tpu.memory_space<vmem>>, %arg21: memref<1x128xf32, #tpu.memory_space<vmem>>, %arg22: memref<1x8x128xf32, #tpu.memory_space<vmem>>) attributes {dimension_semantics = [#tpu.dimension_semantics<parallel>, #tpu.dimension_semantics<parallel>], iteration_bounds = array<i64: 2, 1>, scalar_prefetch = 0 : i64, scratch_operands = 0 : i64, tpu.core_type = #tpu.core_type<tc>, window_params = [{transform_indices = @transform_0, window_bounds = array<i64: 1, 8, 32>}, {transform_indices = @transform_1, window_bounds = array<i64: 1, 8, 32>}, {pipeline_mode = #tpu.pipeline_mode<synchronous>, transform_indices = @transform_2, window_bounds = array<i64: 4, 32, 8>}, {pipeline_mode = #tpu.pipeline_mode<synchronous>, transform_indices = @transform_3, window_bounds = array<i64: 4, 1, 8>}, {pipeline_mode = #tpu.pipeline_mode<synchronous>, transform_indices = @transform_4, window_bounds = array<i64: 4, 32, 8>}, {pipeline_mode = #tpu.pipeline_mode<synchronous>, transform_indices = @transform_5, window_bounds = array<i64: 4, 1, 8>}, {pipeline_mode = #tpu.pipeline_mode<synchronous>, transform_indices = @transform_6, window_bounds = array<i64: 4, 32, 8>}, {pipeline_mode = #tpu.pipeline_mode<synchronous>, transform_indices = @transform_7, window_bounds = array<i64: 4, 1, 8>}, {pipeline_mode = #tpu.pipeline_mode<synchronous>, transform_indices = @transform_8, window_bounds = array<i64: 4, 8, 32>}, {pipeline_mode = #tpu.pipeline_mode<synchronous>, transform_indices = @transform_9, window_bounds = array<i64: 1, 32>}, {pipeline_mode = #tpu.pipeline_mode<synchronous>, transform_indices = @transform_10, window_bounds = array<i64: 1, 32>}, {pipeline_mode = #tpu.pipeline_mode<synchronous>, transform_indices = @transform_11, window_bounds = array<i64: 1, 32>}, {pipeline_mode = #tpu.pipeline_mode<synchronous>, transform_indices = @transform_12, window_bounds = array<i64: 32, 64>}, {pipeline_mode = #tpu.pipeline_mode<synchronous>, transform_indices = @transform_13, window_bounds = array<i64: 1, 64>}, {pipeline_mode = #tpu.pipeline_mode<synchronous>, transform_indices = @transform_14, window_bounds = array<i64: 64, 128>}, {pipeline_mode = #tpu.pipeline_mode<synchronous>, transform_indices = @transform_15, window_bounds = array<i64: 1, 128>}, {pipeline_mode = #tpu.pipeline_mode<synchronous>, transform_indices = @transform_16, window_bounds = array<i64: 32, 128>}, {pipeline_mode = #tpu.pipeline_mode<synchronous>, transform_indices = @transform_17, window_bounds = array<i64: 1, 128>}, {pipeline_mode = #tpu.pipeline_mode<synchronous>, transform_indices = @transform_18, window_bounds = array<i64: 1, 128>}, {pipeline_mode = #tpu.pipeline_mode<synchronous>, transform_indices = @transform_19, window_bounds = array<i64: 1, 128>}, {transform_indices = @transform_20, window_bounds = array<i64: 1, 8, 128>}]} {
    %c0 = arith.constant 0 : index
    %c0_0 = arith.constant 0 : index
    %c0_1 = arith.constant 0 : index
    %0 = vector.load %arg2[%c0, %c0_0, %c0_1] : memref<1x8x32xf32, #tpu.memory_space<vmem>>, vector<1x8x32xf32>
    %1 = vector.shape_cast %0 : vector<1x8x32xf32> to vector<8x32xf32>
    %2 = arith.truncf %1 : vector<8x32xf32> to vector<8x32xbf16>
    %c0_2 = arith.constant 0 : index
    %c0_3 = arith.constant 0 : index
    %c0_4 = arith.constant 0 : index
    %3 = vector.load %arg3[%c0_2, %c0_3, %c0_4] : memref<1x8x32xf32, #tpu.memory_space<vmem>>, vector<1x8x32xf32>
    %4 = vector.shape_cast %3 : vector<1x8x32xf32> to vector<8x32xf32>
    %5 = arith.truncf %4 : vector<8x32xf32> to vector<8x32xbf16>
    %cst = arith.constant 0.000000e+00 : f32
    %6 = vector.broadcast %cst : f32 to vector<8x32xf32>
    %c0_5 = arith.constant 0 : index
    %c0_6 = arith.constant 0 : index
    %c0_7 = arith.constant 0 : index
    %7 = vector.load %arg4[%c0_5, %c0_6, %c0_7] : memref<4x32x8xbf16, #tpu.memory_space<vmem>>, vector<1x32x8xbf16>
    %8 = vector.shape_cast %7 : vector<1x32x8xbf16> to vector<32x8xbf16>
    %cst_8 = arith.constant dense<0.000000e+00> : vector<8x8xf32>
    %9 = tpu.matmul %2, %8, %cst_8 {dimension_numbers = #tpu.dot_dimension_numbers<[1], [0], [0], [1], [0, 0, 1, 1], [], []>} : vector<8x32xbf16>, vector<32x8xbf16>, vector<8x8xf32> -> vector<8x8xf32>
    %c0_9 = arith.constant 0 : index
    %c0_10 = arith.constant 0 : index
    %c0_11 = arith.constant 0 : index
    %10 = vector.load %arg5[%c0_9, %c0_10, %c0_11] : memref<4x1x8xf32, #tpu.memory_space<vmem>>, vector<1x1x8xf32>
    %11 = vector.shape_cast %10 : vector<1x1x8xf32> to vector<1x8xf32>
    %12 = vector.broadcast %11 : vector<1x8xf32> to vector<8x8xf32>
    %13 = arith.addf %9, %12 : vector<8x8xf32>
    %cst_12 = arith.constant 0.353553385 : f32
    %14 = vector.broadcast %cst_12 : f32 to vector<8x8xf32>
    %15 = arith.mulf %13, %14 : vector<8x8xf32>
    %c0_13 = arith.constant 0 : index
    %c0_14 = arith.constant 0 : index
    %c0_15 = arith.constant 0 : index
    %16 = vector.load %arg6[%c0_13, %c0_14, %c0_15] : memref<4x32x8xbf16, #tpu.memory_space<vmem>>, vector<1x32x8xbf16>
    %17 = vector.shape_cast %16 : vector<1x32x8xbf16> to vector<32x8xbf16>
    %cst_16 = arith.constant dense<0.000000e+00> : vector<8x8xf32>
    %18 = tpu.matmul %5, %17, %cst_16 {dimension_numbers = #tpu.dot_dimension_numbers<[1], [0], [0], [1], [0, 0, 1, 1], [], []>} : vector<8x32xbf16>, vector<32x8xbf16>, vector<8x8xf32> -> vector<8x8xf32>
    %c0_17 = arith.constant 0 : index
    %c0_18 = arith.constant 0 : index
    %c0_19 = arith.constant 0 : index
    %19 = vector.load %arg7[%c0_17, %c0_18, %c0_19] : memref<4x1x8xf32, #tpu.memory_space<vmem>>, vector<1x1x8xf32>
    %20 = vector.shape_cast %19 : vector<1x1x8xf32> to vector<1x8xf32>
    %21 = vector.broadcast %20 : vector<1x8xf32> to vector<8x8xf32>
    %22 = arith.addf %18, %21 : vector<8x8xf32>
    %c0_20 = arith.constant 0 : index
    %c0_21 = arith.constant 0 : index
    %c0_22 = arith.constant 0 : index
    %23 = vector.load %arg8[%c0_20, %c0_21, %c0_22] : memref<4x32x8xbf16, #tpu.memory_space<vmem>>, vector<1x32x8xbf16>
    %24 = vector.shape_cast %23 : vector<1x32x8xbf16> to vector<32x8xbf16>
    %cst_23 = arith.constant dense<0.000000e+00> : vector<8x8xf32>
    %25 = tpu.matmul %5, %24, %cst_23 {dimension_numbers = #tpu.dot_dimension_numbers<[1], [0], [0], [1], [0, 0, 1, 1], [], []>} : vector<8x32xbf16>, vector<32x8xbf16>, vector<8x8xf32> -> vector<8x8xf32>
    %c0_24 = arith.constant 0 : index
    %c0_25 = arith.constant 0 : index
    %c0_26 = arith.constant 0 : index
    %26 = vector.load %arg9[%c0_24, %c0_25, %c0_26] : memref<4x1x8xf32, #tpu.memory_space<vmem>>, vector<1x1x8xf32>
    %27 = vector.shape_cast %26 : vector<1x1x8xf32> to vector<1x8xf32>
    %28 = vector.broadcast %27 : vector<1x8xf32> to vector<8x8xf32>
    %29 = arith.addf %25, %28 : vector<8x8xf32>
    %30 = arith.truncf %15 : vector<8x8xf32> to vector<8x8xbf16>
    %31 = arith.truncf %22 : vector<8x8xf32> to vector<8x8xbf16>
    "tpu.trace_start"() <{level = 10 : i32, message = "qd,kd->qk"}> : () -> ()
    %cst_27 = arith.constant dense<0.000000e+00> : vector<8x8xf32>
    %32 = tpu.matmul %30, %31, %cst_27 {dimension_numbers = #tpu.dot_dimension_numbers<[1], [1], [0], [0], [0, 0, 1, 0], [], []>} : vector<8x8xbf16>, vector<8x8xbf16>, vector<8x8xf32> -> vector<8x8xf32>
    "tpu.trace_stop"() : () -> ()
    %cst_28 = arith.constant dense<0xFF800000> : vector<8xf32>
    %33 = vector.multi_reduction <maximumf>, %32, %cst_28 [1] : vector<8x8xf32> to vector<8xf32>
    %34 = vector.shape_cast %33 : vector<8xf32> to vector<8x1xf32>
    %35 = vector.broadcast %34 : vector<8x1xf32> to vector<8x8xf32>
    %36 = arith.subf %32, %35 : vector<8x8xf32>
    %37 = math.exp %36 : vector<8x8xf32>
    %cst_29 = arith.constant dense<0.000000e+00> : vector<8xf32>
    %38 = vector.multi_reduction <add>, %37, %cst_29 [1] : vector<8x8xf32> to vector<8xf32>
    %39 = vector.shape_cast %38 : vector<8xf32> to vector<8x1xf32>
    %40 = tpu.reciprocal %39 {approx = true} : vector<8x1xf32> -> vector<8x1xf32>
    %41 = vector.broadcast %40 : vector<8x1xf32> to vector<8x8xf32>
    %42 = arith.mulf %37, %41 : vector<8x8xf32>
    %43 = arith.truncf %42 : vector<8x8xf32> to vector<8x8xbf16>
    %44 = arith.truncf %29 : vector<8x8xf32> to vector<8x8xbf16>
    %cst_30 = arith.constant dense<0.000000e+00> : vector<8x8xf32>
    %45 = tpu.matmul %43, %44, %cst_30 {dimension_numbers = #tpu.dot_dimension_numbers<[1], [0], [0], [1], [0, 0, 1, 1], [], []>} : vector<8x8xbf16>, vector<8x8xbf16>, vector<8x8xf32> -> vector<8x8xf32>
    %46 = arith.truncf %45 : vector<8x8xf32> to vector<8x8xbf16>
    %c0_31 = arith.constant 0 : index
    %c0_32 = arith.constant 0 : index
    %c0_33 = arith.constant 0 : index
    %47 = vector.load %arg10[%c0_31, %c0_32, %c0_33] : memref<4x8x32xbf16, #tpu.memory_space<vmem>>, vector<1x8x32xbf16>
    %48 = vector.shape_cast %47 : vector<1x8x32xbf16> to vector<8x32xbf16>
    %cst_34 = arith.constant dense<0.000000e+00> : vector<8x32xf32>
    %49 = tpu.matmul %46, %48, %cst_34 {dimension_numbers = #tpu.dot_dimension_numbers<[1], [0], [0], [1], [0, 0, 1, 1], [], []>} : vector<8x8xbf16>, vector<8x32xbf16>, vector<8x32xf32> -> vector<8x32xf32>
    %50 = arith.addf %6, %49 : vector<8x32xf32>
    %c1 = arith.constant 1 : index
    %c0_35 = arith.constant 0 : index
    %c0_36 = arith.constant 0 : index
    %51 = vector.load %arg4[%c1, %c0_35, %c0_36] : memref<4x32x8xbf16, #tpu.memory_space<vmem>>, vector<1x32x8xbf16>
    %52 = vector.shape_cast %51 : vector<1x32x8xbf16> to vector<32x8xbf16>
    %cst_37 = arith.constant dense<0.000000e+00> : vector<8x8xf32>
    %53 = tpu.matmul %2, %52, %cst_37 {dimension_numbers = #tpu.dot_dimension_numbers<[1], [0], [0], [1], [0, 0, 1, 1], [], []>} : vector<8x32xbf16>, vector<32x8xbf16>, vector<8x8xf32> -> vector<8x8xf32>
    %c1_38 = arith.constant 1 : index
    %c0_39 = arith.constant 0 : index
    %c0_40 = arith.constant 0 : index
    %54 = vector.load %arg5[%c1_38, %c0_39, %c0_40] : memref<4x1x8xf32, #tpu.memory_space<vmem>>, vector<1x1x8xf32>
    %55 = vector.shape_cast %54 : vector<1x1x8xf32> to vector<1x8xf32>
    %56 = vector.broadcast %55 : vector<1x8xf32> to vector<8x8xf32>
    %57 = arith.addf %53, %56 : vector<8x8xf32>
    %cst_41 = arith.constant 0.353553385 : f32
    %58 = vector.broadcast %cst_41 : f32 to vector<8x8xf32>
    %59 = arith.mulf %57, %58 : vector<8x8xf32>
    %c1_42 = arith.constant 1 : index
    %c0_43 = arith.constant 0 : index
    %c0_44 = arith.constant 0 : index
    %60 = vector.load %arg6[%c1_42, %c0_43, %c0_44] : memref<4x32x8xbf16, #tpu.memory_space<vmem>>, vector<1x32x8xbf16>
    %61 = vector.shape_cast %60 : vector<1x32x8xbf16> to vector<32x8xbf16>
    %cst_45 = arith.constant dense<0.000000e+00> : vector<8x8xf32>
    %62 = tpu.matmul %5, %61, %cst_45 {dimension_numbers = #tpu.dot_dimension_numbers<[1], [0], [0], [1], [0, 0, 1, 1], [], []>} : vector<8x32xbf16>, vector<32x8xbf16>, vector<8x8xf32> -> vector<8x8xf32>
    %c1_46 = arith.constant 1 : index
    %c0_47 = arith.constant 0 : index
    %c0_48 = arith.constant 0 : index
    %63 = vector.load %arg7[%c1_46, %c0_47, %c0_48] : memref<4x1x8xf32, #tpu.memory_space<vmem>>, vector<1x1x8xf32>
    %64 = vector.shape_cast %63 : vector<1x1x8xf32> to vector<1x8xf32>
    %65 = vector.broadcast %64 : vector<1x8xf32> to vector<8x8xf32>
    %66 = arith.addf %62, %65 : vector<8x8xf32>
    %c1_49 = arith.constant 1 : index
    %c0_50 = arith.constant 0 : index
    %c0_51 = arith.constant 0 : index
    %67 = vector.load %arg8[%c1_49, %c0_50, %c0_51] : memref<4x32x8xbf16, #tpu.memory_space<vmem>>, vector<1x32x8xbf16>
    %68 = vector.shape_cast %67 : vector<1x32x8xbf16> to vector<32x8xbf16>
    %cst_52 = arith.constant dense<0.000000e+00> : vector<8x8xf32>
    %69 = tpu.matmul %5, %68, %cst_52 {dimension_numbers = #tpu.dot_dimension_numbers<[1], [0], [0], [1], [0, 0, 1, 1], [], []>} : vector<8x32xbf16>, vector<32x8xbf16>, vector<8x8xf32> -> vector<8x8xf32>
    %c1_53 = arith.constant 1 : index
    %c0_54 = arith.constant 0 : index
    %c0_55 = arith.constant 0 : index
    %70 = vector.load %arg9[%c1_53, %c0_54, %c0_55] : memref<4x1x8xf32, #tpu.memory_space<vmem>>, vector<1x1x8xf32>
    %71 = vector.shape_cast %70 : vector<1x1x8xf32> to vector<1x8xf32>
    %72 = vector.broadcast %71 : vector<1x8xf32> to vector<8x8xf32>
    %73 = arith.addf %69, %72 : vector<8x8xf32>
    %74 = arith.truncf %59 : vector<8x8xf32> to vector<8x8xbf16>
    %75 = arith.truncf %66 : vector<8x8xf32> to vector<8x8xbf16>
    "tpu.trace_start"() <{level = 10 : i32, message = "qd,kd->qk"}> : () -> ()
    %cst_56 = arith.constant dense<0.000000e+00> : vector<8x8xf32>
    %76 = tpu.matmul %74, %75, %cst_56 {dimension_numbers = #tpu.dot_dimension_numbers<[1], [1], [0], [0], [0, 0, 1, 0], [], []>} : vector<8x8xbf16>, vector<8x8xbf16>, vector<8x8xf32> -> vector<8x8xf32>
    "tpu.trace_stop"() : () -> ()
    %cst_57 = arith.constant dense<0xFF800000> : vector<8xf32>
    %77 = vector.multi_reduction <maximumf>, %76, %cst_57 [1] : vector<8x8xf32> to vector<8xf32>
    %78 = vector.shape_cast %77 : vector<8xf32> to vector<8x1xf32>
    %79 = vector.broadcast %78 : vector<8x1xf32> to vector<8x8xf32>
    %80 = arith.subf %76, %79 : vector<8x8xf32>
    %81 = math.exp %80 : vector<8x8xf32>
    %cst_58 = arith.constant dense<0.000000e+00> : vector<8xf32>
    %82 = vector.multi_reduction <add>, %81, %cst_58 [1] : vector<8x8xf32> to vector<8xf32>
    %83 = vector.shape_cast %82 : vector<8xf32> to vector<8x1xf32>
    %84 = tpu.reciprocal %83 {approx = true} : vector<8x1xf32> -> vector<8x1xf32>
    %85 = vector.broadcast %84 : vector<8x1xf32> to vector<8x8xf32>
    %86 = arith.mulf %81, %85 : vector<8x8xf32>
    %87 = arith.truncf %86 : vector<8x8xf32> to vector<8x8xbf16>
    %88 = arith.truncf %73 : vector<8x8xf32> to vector<8x8xbf16>
    %cst_59 = arith.constant dense<0.000000e+00> : vector<8x8xf32>
    %89 = tpu.matmul %87, %88, %cst_59 {dimension_numbers = #tpu.dot_dimension_numbers<[1], [0], [0], [1], [0, 0, 1, 1], [], []>} : vector<8x8xbf16>, vector<8x8xbf16>, vector<8x8xf32> -> vector<8x8xf32>
    %90 = arith.truncf %89 : vector<8x8xf32> to vector<8x8xbf16>
    %c1_60 = arith.constant 1 : index
    %c0_61 = arith.constant 0 : index
    %c0_62 = arith.constant 0 : index
    %91 = vector.load %arg10[%c1_60, %c0_61, %c0_62] : memref<4x8x32xbf16, #tpu.memory_space<vmem>>, vector<1x8x32xbf16>
    %92 = vector.shape_cast %91 : vector<1x8x32xbf16> to vector<8x32xbf16>
    %cst_63 = arith.constant dense<0.000000e+00> : vector<8x32xf32>
    %93 = tpu.matmul %90, %92, %cst_63 {dimension_numbers = #tpu.dot_dimension_numbers<[1], [0], [0], [1], [0, 0, 1, 1], [], []>} : vector<8x8xbf16>, vector<8x32xbf16>, vector<8x32xf32> -> vector<8x32xf32>
    %94 = arith.addf %50, %93 : vector<8x32xf32>
    %c2 = arith.constant 2 : index
    %c0_64 = arith.constant 0 : index
    %c0_65 = arith.constant 0 : index
    %95 = vector.load %arg4[%c2, %c0_64, %c0_65] : memref<4x32x8xbf16, #tpu.memory_space<vmem>>, vector<1x32x8xbf16>
    %96 = vector.shape_cast %95 : vector<1x32x8xbf16> to vector<32x8xbf16>
    %cst_66 = arith.constant dense<0.000000e+00> : vector<8x8xf32>
    %97 = tpu.matmul %2, %96, %cst_66 {dimension_numbers = #tpu.dot_dimension_numbers<[1], [0], [0], [1], [0, 0, 1, 1], [], []>} : vector<8x32xbf16>, vector<32x8xbf16>, vector<8x8xf32> -> vector<8x8xf32>
    %c2_67 = arith.constant 2 : index
    %c0_68 = arith.constant 0 : index
    %c0_69 = arith.constant 0 : index
    %98 = vector.load %arg5[%c2_67, %c0_68, %c0_69] : memref<4x1x8xf32, #tpu.memory_space<vmem>>, vector<1x1x8xf32>
    %99 = vector.shape_cast %98 : vector<1x1x8xf32> to vector<1x8xf32>
    %100 = vector.broadcast %99 : vector<1x8xf32> to vector<8x8xf32>
    %101 = arith.addf %97, %100 : vector<8x8xf32>
    %cst_70 = arith.constant 0.353553385 : f32
    %102 = vector.broadcast %cst_70 : f32 to vector<8x8xf32>
    %103 = arith.mulf %101, %102 : vector<8x8xf32>
    %c2_71 = arith.constant 2 : index
    %c0_72 = arith.constant 0 : index
    %c0_73 = arith.constant 0 : index
    %104 = vector.load %arg6[%c2_71, %c0_72, %c0_73] : memref<4x32x8xbf16, #tpu.memory_space<vmem>>, vector<1x32x8xbf16>
    %105 = vector.shape_cast %104 : vector<1x32x8xbf16> to vector<32x8xbf16>
    %cst_74 = arith.constant dense<0.000000e+00> : vector<8x8xf32>
    %106 = tpu.matmul %5, %105, %cst_74 {dimension_numbers = #tpu.dot_dimension_numbers<[1], [0], [0], [1], [0, 0, 1, 1], [], []>} : vector<8x32xbf16>, vector<32x8xbf16>, vector<8x8xf32> -> vector<8x8xf32>
    %c2_75 = arith.constant 2 : index
    %c0_76 = arith.constant 0 : index
    %c0_77 = arith.constant 0 : index
    %107 = vector.load %arg7[%c2_75, %c0_76, %c0_77] : memref<4x1x8xf32, #tpu.memory_space<vmem>>, vector<1x1x8xf32>
    %108 = vector.shape_cast %107 : vector<1x1x8xf32> to vector<1x8xf32>
    %109 = vector.broadcast %108 : vector<1x8xf32> to vector<8x8xf32>
    %110 = arith.addf %106, %109 : vector<8x8xf32>
    %c2_78 = arith.constant 2 : index
    %c0_79 = arith.constant 0 : index
    %c0_80 = arith.constant 0 : index
    %111 = vector.load %arg8[%c2_78, %c0_79, %c0_80] : memref<4x32x8xbf16, #tpu.memory_space<vmem>>, vector<1x32x8xbf16>
    %112 = vector.shape_cast %111 : vector<1x32x8xbf16> to vector<32x8xbf16>
    %cst_81 = arith.constant dense<0.000000e+00> : vector<8x8xf32>
    %113 = tpu.matmul %5, %112, %cst_81 {dimension_numbers = #tpu.dot_dimension_numbers<[1], [0], [0], [1], [0, 0, 1, 1], [], []>} : vector<8x32xbf16>, vector<32x8xbf16>, vector<8x8xf32> -> vector<8x8xf32>
    %c2_82 = arith.constant 2 : index
    %c0_83 = arith.constant 0 : index
    %c0_84 = arith.constant 0 : index
    %114 = vector.load %arg9[%c2_82, %c0_83, %c0_84] : memref<4x1x8xf32, #tpu.memory_space<vmem>>, vector<1x1x8xf32>
    %115 = vector.shape_cast %114 : vector<1x1x8xf32> to vector<1x8xf32>
    %116 = vector.broadcast %115 : vector<1x8xf32> to vector<8x8xf32>
    %117 = arith.addf %113, %116 : vector<8x8xf32>
    %118 = arith.truncf %103 : vector<8x8xf32> to vector<8x8xbf16>
    %119 = arith.truncf %110 : vector<8x8xf32> to vector<8x8xbf16>
    "tpu.trace_start"() <{level = 10 : i32, message = "qd,kd->qk"}> : () -> ()
    %cst_85 = arith.constant dense<0.000000e+00> : vector<8x8xf32>
    %120 = tpu.matmul %118, %119, %cst_85 {dimension_numbers = #tpu.dot_dimension_numbers<[1], [1], [0], [0], [0, 0, 1, 0], [], []>} : vector<8x8xbf16>, vector<8x8xbf16>, vector<8x8xf32> -> vector<8x8xf32>
    "tpu.trace_stop"() : () -> ()
    %cst_86 = arith.constant dense<0xFF800000> : vector<8xf32>
    %121 = vector.multi_reduction <maximumf>, %120, %cst_86 [1] : vector<8x8xf32> to vector<8xf32>
    %122 = vector.shape_cast %121 : vector<8xf32> to vector<8x1xf32>
    %123 = vector.broadcast %122 : vector<8x1xf32> to vector<8x8xf32>
    %124 = arith.subf %120, %123 : vector<8x8xf32>
    %125 = math.exp %124 : vector<8x8xf32>
    %cst_87 = arith.constant dense<0.000000e+00> : vector<8xf32>
    %126 = vector.multi_reduction <add>, %125, %cst_87 [1] : vector<8x8xf32> to vector<8xf32>
    %127 = vector.shape_cast %126 : vector<8xf32> to vector<8x1xf32>
    %128 = tpu.reciprocal %127 {approx = true} : vector<8x1xf32> -> vector<8x1xf32>
    %129 = vector.broadcast %128 : vector<8x1xf32> to vector<8x8xf32>
    %130 = arith.mulf %125, %129 : vector<8x8xf32>
    %131 = arith.truncf %130 : vector<8x8xf32> to vector<8x8xbf16>
    %132 = arith.truncf %117 : vector<8x8xf32> to vector<8x8xbf16>
    %cst_88 = arith.constant dense<0.000000e+00> : vector<8x8xf32>
    %133 = tpu.matmul %131, %132, %cst_88 {dimension_numbers = #tpu.dot_dimension_numbers<[1], [0], [0], [1], [0, 0, 1, 1], [], []>} : vector<8x8xbf16>, vector<8x8xbf16>, vector<8x8xf32> -> vector<8x8xf32>
    %134 = arith.truncf %133 : vector<8x8xf32> to vector<8x8xbf16>
    %c2_89 = arith.constant 2 : index
    %c0_90 = arith.constant 0 : index
    %c0_91 = arith.constant 0 : index
    %135 = vector.load %arg10[%c2_89, %c0_90, %c0_91] : memref<4x8x32xbf16, #tpu.memory_space<vmem>>, vector<1x8x32xbf16>
    %136 = vector.shape_cast %135 : vector<1x8x32xbf16> to vector<8x32xbf16>
    %cst_92 = arith.constant dense<0.000000e+00> : vector<8x32xf32>
    %137 = tpu.matmul %134, %136, %cst_92 {dimension_numbers = #tpu.dot_dimension_numbers<[1], [0], [0], [1], [0, 0, 1, 1], [], []>} : vector<8x8xbf16>, vector<8x32xbf16>, vector<8x32xf32> -> vector<8x32xf32>
    %138 = arith.addf %94, %137 : vector<8x32xf32>
    %c3 = arith.constant 3 : index
    %c0_93 = arith.constant 0 : index
    %c0_94 = arith.constant 0 : index
    %139 = vector.load %arg4[%c3, %c0_93, %c0_94] : memref<4x32x8xbf16, #tpu.memory_space<vmem>>, vector<1x32x8xbf16>
    %140 = vector.shape_cast %139 : vector<1x32x8xbf16> to vector<32x8xbf16>
    %cst_95 = arith.constant dense<0.000000e+00> : vector<8x8xf32>
    %141 = tpu.matmul %2, %140, %cst_95 {dimension_numbers = #tpu.dot_dimension_numbers<[1], [0], [0], [1], [0, 0, 1, 1], [], []>} : vector<8x32xbf16>, vector<32x8xbf16>, vector<8x8xf32> -> vector<8x8xf32>
    %c3_96 = arith.constant 3 : index
    %c0_97 = arith.constant 0 : index
    %c0_98 = arith.constant 0 : index
    %142 = vector.load %arg5[%c3_96, %c0_97, %c0_98] : memref<4x1x8xf32, #tpu.memory_space<vmem>>, vector<1x1x8xf32>
    %143 = vector.shape_cast %142 : vector<1x1x8xf32> to vector<1x8xf32>
    %144 = vector.broadcast %143 : vector<1x8xf32> to vector<8x8xf32>
    %145 = arith.addf %141, %144 : vector<8x8xf32>
    %cst_99 = arith.constant 0.353553385 : f32
    %146 = vector.broadcast %cst_99 : f32 to vector<8x8xf32>
    %147 = arith.mulf %145, %146 : vector<8x8xf32>
    %c3_100 = arith.constant 3 : index
    %c0_101 = arith.constant 0 : index
    %c0_102 = arith.constant 0 : index
    %148 = vector.load %arg6[%c3_100, %c0_101, %c0_102] : memref<4x32x8xbf16, #tpu.memory_space<vmem>>, vector<1x32x8xbf16>
    %149 = vector.shape_cast %148 : vector<1x32x8xbf16> to vector<32x8xbf16>
    %cst_103 = arith.constant dense<0.000000e+00> : vector<8x8xf32>
    %150 = tpu.matmul %5, %149, %cst_103 {dimension_numbers = #tpu.dot_dimension_numbers<[1], [0], [0], [1], [0, 0, 1, 1], [], []>} : vector<8x32xbf16>, vector<32x8xbf16>, vector<8x8xf32> -> vector<8x8xf32>
    %c3_104 = arith.constant 3 : index
    %c0_105 = arith.constant 0 : index
    %c0_106 = arith.constant 0 : index
    %151 = vector.load %arg7[%c3_104, %c0_105, %c0_106] : memref<4x1x8xf32, #tpu.memory_space<vmem>>, vector<1x1x8xf32>
    %152 = vector.shape_cast %151 : vector<1x1x8xf32> to vector<1x8xf32>
    %153 = vector.broadcast %152 : vector<1x8xf32> to vector<8x8xf32>
    %154 = arith.addf %150, %153 : vector<8x8xf32>
    %c3_107 = arith.constant 3 : index
    %c0_108 = arith.constant 0 : index
    %c0_109 = arith.constant 0 : index
    %155 = vector.load %arg8[%c3_107, %c0_108, %c0_109] : memref<4x32x8xbf16, #tpu.memory_space<vmem>>, vector<1x32x8xbf16>
    %156 = vector.shape_cast %155 : vector<1x32x8xbf16> to vector<32x8xbf16>
    %cst_110 = arith.constant dense<0.000000e+00> : vector<8x8xf32>
    %157 = tpu.matmul %5, %156, %cst_110 {dimension_numbers = #tpu.dot_dimension_numbers<[1], [0], [0], [1], [0, 0, 1, 1], [], []>} : vector<8x32xbf16>, vector<32x8xbf16>, vector<8x8xf32> -> vector<8x8xf32>
    %c3_111 = arith.constant 3 : index
    %c0_112 = arith.constant 0 : index
    %c0_113 = arith.constant 0 : index
    %158 = vector.load %arg9[%c3_111, %c0_112, %c0_113] : memref<4x1x8xf32, #tpu.memory_space<vmem>>, vector<1x1x8xf32>
    %159 = vector.shape_cast %158 : vector<1x1x8xf32> to vector<1x8xf32>
    %160 = vector.broadcast %159 : vector<1x8xf32> to vector<8x8xf32>
    %161 = arith.addf %157, %160 : vector<8x8xf32>
    %162 = arith.truncf %147 : vector<8x8xf32> to vector<8x8xbf16>
    %163 = arith.truncf %154 : vector<8x8xf32> to vector<8x8xbf16>
    "tpu.trace_start"() <{level = 10 : i32, message = "qd,kd->qk"}> : () -> ()
    %cst_114 = arith.constant dense<0.000000e+00> : vector<8x8xf32>
    %164 = tpu.matmul %162, %163, %cst_114 {dimension_numbers = #tpu.dot_dimension_numbers<[1], [1], [0], [0], [0, 0, 1, 0], [], []>} : vector<8x8xbf16>, vector<8x8xbf16>, vector<8x8xf32> -> vector<8x8xf32>
    "tpu.trace_stop"() : () -> ()
    %cst_115 = arith.constant dense<0xFF800000> : vector<8xf32>
    %165 = vector.multi_reduction <maximumf>, %164, %cst_115 [1] : vector<8x8xf32> to vector<8xf32>
    %166 = vector.shape_cast %165 : vector<8xf32> to vector<8x1xf32>
    %167 = vector.broadcast %166 : vector<8x1xf32> to vector<8x8xf32>
    %168 = arith.subf %164, %167 : vector<8x8xf32>
    %169 = math.exp %168 : vector<8x8xf32>
    %cst_116 = arith.constant dense<0.000000e+00> : vector<8xf32>
    %170 = vector.multi_reduction <add>, %169, %cst_116 [1] : vector<8x8xf32> to vector<8xf32>
    %171 = vector.shape_cast %170 : vector<8xf32> to vector<8x1xf32>
    %172 = tpu.reciprocal %171 {approx = true} : vector<8x1xf32> -> vector<8x1xf32>
    %173 = vector.broadcast %172 : vector<8x1xf32> to vector<8x8xf32>
    %174 = arith.mulf %169, %173 : vector<8x8xf32>
    %175 = arith.truncf %174 : vector<8x8xf32> to vector<8x8xbf16>
    %176 = arith.truncf %161 : vector<8x8xf32> to vector<8x8xbf16>
    %cst_117 = arith.constant dense<0.000000e+00> : vector<8x8xf32>
    %177 = tpu.matmul %175, %176, %cst_117 {dimension_numbers = #tpu.dot_dimension_numbers<[1], [0], [0], [1], [0, 0, 1, 1], [], []>} : vector<8x8xbf16>, vector<8x8xbf16>, vector<8x8xf32> -> vector<8x8xf32>
    %178 = arith.truncf %177 : vector<8x8xf32> to vector<8x8xbf16>
    %c3_118 = arith.constant 3 : index
    %c0_119 = arith.constant 0 : index
    %c0_120 = arith.constant 0 : index
    %179 = vector.load %arg10[%c3_118, %c0_119, %c0_120] : memref<4x8x32xbf16, #tpu.memory_space<vmem>>, vector<1x8x32xbf16>
    %180 = vector.shape_cast %179 : vector<1x8x32xbf16> to vector<8x32xbf16>
    %cst_121 = arith.constant dense<0.000000e+00> : vector<8x32xf32>
    %181 = tpu.matmul %178, %180, %cst_121 {dimension_numbers = #tpu.dot_dimension_numbers<[1], [0], [0], [1], [0, 0, 1, 1], [], []>} : vector<8x8xbf16>, vector<8x32xbf16>, vector<8x32xf32> -> vector<8x32xf32>
    %182 = arith.addf %138, %181 : vector<8x32xf32>
    %c0_122 = arith.constant 0 : index
    %c0_123 = arith.constant 0 : index
    %183 = vector.load %arg11[%c0_122, %c0_123] : memref<1x32xf32, #tpu.memory_space<vmem>>, vector<1x32xf32>
    %184 = vector.broadcast %183 : vector<1x32xf32> to vector<8x32xf32>
    %185 = arith.addf %182, %184 : vector<8x32xf32>
    %186 = arith.addf %185, %1 : vector<8x32xf32>
    %cst_124 = arith.constant dense<0.000000e+00> : vector<8xf32>
    %187 = vector.multi_reduction <add>, %186, %cst_124 [1] : vector<8x32xf32> to vector<8xf32>
    %188 = vector.shape_cast %187 : vector<8xf32> to vector<8x1xf32>
    %cst_125 = arith.constant 3.200000e+01 : f32
    %189 = vector.broadcast %cst_125 : f32 to vector<8x1xf32>
    %190 = arith.divf %188, %189 : vector<8x1xf32>
    %191 = vector.broadcast %190 : vector<8x1xf32> to vector<8x32xf32>
    %192 = arith.subf %186, %191 : vector<8x32xf32>
    %193 = arith.mulf %192, %192 : vector<8x32xf32>
    %cst_126 = arith.constant dense<0.000000e+00> : vector<8xf32>
    %194 = vector.multi_reduction <add>, %193, %cst_126 [1] : vector<8x32xf32> to vector<8xf32>
    %195 = vector.shape_cast %194 : vector<8xf32> to vector<8x1xf32>
    %cst_127 = arith.constant 3.200000e+01 : f32
    %196 = vector.broadcast %cst_127 : f32 to vector<8x1xf32>
    %197 = arith.divf %195, %196 : vector<8x1xf32>
    %cst_128 = arith.constant 9.99999974E-6 : f32
    %198 = vector.broadcast %cst_128 : f32 to vector<8x1xf32>
    %199 = arith.addf %197, %198 : vector<8x1xf32>
    %200 = math.rsqrt %199 : vector<8x1xf32>
    %201 = vector.broadcast %200 : vector<8x1xf32> to vector<8x32xf32>
    %202 = arith.mulf %192, %201 : vector<8x32xf32>
    %c0_129 = arith.constant 0 : index
    %c0_130 = arith.constant 0 : index
    %203 = vector.load %arg12[%c0_129, %c0_130] : memref<1x32xf32, #tpu.memory_space<vmem>>, vector<1x32xf32>
    %204 = vector.broadcast %203 : vector<1x32xf32> to vector<8x32xf32>
    %205 = arith.mulf %202, %204 : vector<8x32xf32>
    %c0_131 = arith.constant 0 : index
    %c0_132 = arith.constant 0 : index
    %206 = vector.load %arg13[%c0_131, %c0_132] : memref<1x32xf32, #tpu.memory_space<vmem>>, vector<1x32xf32>
    %207 = vector.broadcast %206 : vector<1x32xf32> to vector<8x32xf32>
    %208 = arith.addf %205, %207 : vector<8x32xf32>
    %209 = arith.truncf %208 : vector<8x32xf32> to vector<8x32xbf16>
    %c0_133 = arith.constant 0 : index
    %c0_134 = arith.constant 0 : index
    %210 = vector.load %arg14[%c0_133, %c0_134] : memref<32x64xbf16, #tpu.memory_space<vmem>>, vector<32x64xbf16>
    %cst_135 = arith.constant dense<0.000000e+00> : vector<8x64xf32>
    %211 = tpu.matmul %209, %210, %cst_135 {dimension_numbers = #tpu.dot_dimension_numbers<[1], [0], [0], [1], [0, 0, 1, 1], [], []>} : vector<8x32xbf16>, vector<32x64xbf16>, vector<8x64xf32> -> vector<8x64xf32>
    %c0_136 = arith.constant 0 : index
    %c0_137 = arith.constant 0 : index
    %212 = vector.load %arg15[%c0_136, %c0_137] : memref<1x64xf32, #tpu.memory_space<vmem>>, vector<1x64xf32>
    %213 = vector.broadcast %212 : vector<1x64xf32> to vector<8x64xf32>
    %214 = arith.addf %211, %213 : vector<8x64xf32>
    %cst_138 = arith.constant 0.000000e+00 : f32
    %215 = vector.broadcast %cst_138 : f32 to vector<8x64xf32>
    %216 = arith.maximumf %214, %215 : vector<8x64xf32>
    %217 = arith.truncf %216 : vector<8x64xf32> to vector<8x64xbf16>
    %c0_139 = arith.constant 0 : index
    %c0_140 = arith.constant 0 : index
    %218 = vector.load %arg16[%c0_139, %c0_140] : memref<64x128xbf16, #tpu.memory_space<vmem>>, vector<64x128xbf16>
    %cst_141 = arith.constant dense<0.000000e+00> : vector<8x128xf32>
    %219 = tpu.matmul %217, %218, %cst_141 {dimension_numbers = #tpu.dot_dimension_numbers<[1], [0], [0], [1], [0, 0, 1, 1], [], []>} : vector<8x64xbf16>, vector<64x128xbf16>, vector<8x128xf32> -> vector<8x128xf32>
    %c0_142 = arith.constant 0 : index
    %c0_143 = arith.constant 0 : index
    %220 = vector.load %arg17[%c0_142, %c0_143] : memref<1x128xf32, #tpu.memory_space<vmem>>, vector<1x128xf32>
    %221 = vector.broadcast %220 : vector<1x128xf32> to vector<8x128xf32>
    %222 = arith.addf %219, %221 : vector<8x128xf32>
    %c0_144 = arith.constant 0 : index
    %c0_145 = arith.constant 0 : index
    %223 = vector.load %arg18[%c0_144, %c0_145] : memref<32x128xbf16, #tpu.memory_space<vmem>>, vector<32x128xbf16>
    %cst_146 = arith.constant dense<0.000000e+00> : vector<8x128xf32>
    %224 = tpu.matmul %209, %223, %cst_146 {dimension_numbers = #tpu.dot_dimension_numbers<[1], [0], [0], [1], [0, 0, 1, 1], [], []>} : vector<8x32xbf16>, vector<32x128xbf16>, vector<8x128xf32> -> vector<8x128xf32>
    %c0_147 = arith.constant 0 : index
    %c0_148 = arith.constant 0 : index
    %225 = vector.load %arg19[%c0_147, %c0_148] : memref<1x128xf32, #tpu.memory_space<vmem>>, vector<1x128xf32>
    %226 = vector.broadcast %225 : vector<1x128xf32> to vector<8x128xf32>
    %227 = arith.addf %224, %226 : vector<8x128xf32>
    %228 = arith.addf %222, %227 : vector<8x128xf32>
    %229 = tpu.iota {dimensions = array<i32: 1>} : vector<1x128xi32>
    %c48_i32 = arith.constant 48 : i32
    %230 = vector.broadcast %c48_i32 : i32 to vector<1x128xi32>
    %231 = arith.cmpi slt, %229, %230 : vector<1x128xi32>
    %232 = arith.extui %231 : vector<1x128xi1> to vector<1x128xi32>
    %233 = arith.sitofp %232 : vector<1x128xi32> to vector<1x128xf32>
    %cst_149 = arith.constant dense<0.000000e+00> : vector<8xf32>
    %234 = vector.multi_reduction <add>, %228, %cst_149 [1] : vector<8x128xf32> to vector<8xf32>
    %235 = vector.shape_cast %234 : vector<8xf32> to vector<8x1xf32>
    %cst_150 = arith.constant 0.020833334 : f32
    %236 = vector.broadcast %cst_150 : f32 to vector<8x1xf32>
    %237 = arith.mulf %235, %236 : vector<8x1xf32>
    %238 = vector.broadcast %237 : vector<8x1xf32> to vector<8x128xf32>
    %239 = arith.subf %228, %238 : vector<8x128xf32>
    %240 = vector.broadcast %233 : vector<1x128xf32> to vector<8x128xf32>
    %241 = arith.mulf %239, %240 : vector<8x128xf32>
    %242 = arith.mulf %241, %241 : vector<8x128xf32>
    %cst_151 = arith.constant dense<0.000000e+00> : vector<8xf32>
    %243 = vector.multi_reduction <add>, %242, %cst_151 [1] : vector<8x128xf32> to vector<8xf32>
    %244 = vector.shape_cast %243 : vector<8xf32> to vector<8x1xf32>
    %cst_152 = arith.constant 0.020833334 : f32
    %245 = vector.broadcast %cst_152 : f32 to vector<8x1xf32>
    %246 = arith.mulf %244, %245 : vector<8x1xf32>
    %cst_153 = arith.constant 9.99999974E-6 : f32
    %247 = vector.broadcast %cst_153 : f32 to vector<8x1xf32>
    %248 = arith.addf %246, %247 : vector<8x1xf32>
    %249 = math.rsqrt %248 : vector<8x1xf32>
    %250 = vector.broadcast %249 : vector<8x1xf32> to vector<8x128xf32>
    %251 = arith.mulf %241, %250 : vector<8x128xf32>
    %c0_154 = arith.constant 0 : index
    %c0_155 = arith.constant 0 : index
    %252 = vector.load %arg20[%c0_154, %c0_155] : memref<1x128xf32, #tpu.memory_space<vmem>>, vector<1x128xf32>
    %253 = vector.broadcast %252 : vector<1x128xf32> to vector<8x128xf32>
    %254 = arith.mulf %251, %253 : vector<8x128xf32>
    %c0_156 = arith.constant 0 : index
    %c0_157 = arith.constant 0 : index
    %255 = vector.load %arg21[%c0_156, %c0_157] : memref<1x128xf32, #tpu.memory_space<vmem>>, vector<1x128xf32>
    %256 = vector.broadcast %255 : vector<1x128xf32> to vector<8x128xf32>
    %257 = arith.addf %254, %256 : vector<8x128xf32>
    %c0_158 = arith.constant 0 : index
    %c0_159 = arith.constant 0 : index
    %c0_160 = arith.constant 0 : index
    %258 = vector.load %arg22[%c0_158, %c0_159, %c0_160] : memref<1x8x128xf32, #tpu.memory_space<vmem>>, vector<1x8x128xf32>
    %259 = vector.shape_cast %258 : vector<1x8x128xf32> to vector<8x128xf32>
    %260 = vector.shape_cast %257 : vector<8x128xf32> to vector<1x8x128xf32>
    tpu.vector_store %arg22[%c0_158, %c0_159, %c0_160], %260 {strides = array<i32>} : memref<1x8x128xf32, #tpu.memory_space<vmem>>, vector<1x8x128xf32>,
    return
  }
  func.func @transform_0(%arg0: i32, %arg1: i32) -> (i32, i32, i32) {
    %c0_i32 = arith.constant 0 : i32
    %c0_i32_0 = arith.constant 0 : i32
    return %arg0, %arg1, %c0_i32 : i32, i32, i32
  }
  func.func @transform_1(%arg0: i32, %arg1: i32) -> (i32, i32, i32) {
    %c0_i32 = arith.constant 0 : i32
    %c0_i32_0 = arith.constant 0 : i32
    %c0_i32_1 = arith.constant 0 : i32
    return %arg0, %c0_i32, %c0_i32_0 : i32, i32, i32
  }
  func.func @transform_2(%arg0: i32, %arg1: i32) -> (i32, i32, i32) {
    %c0_i32 = arith.constant 0 : i32
    %c0_i32_0 = arith.constant 0 : i32
    %c0_i32_1 = arith.constant 0 : i32
    %c0_i32_2 = arith.constant 0 : i32
    return %c0_i32, %c0_i32_0, %c0_i32_1 : i32, i32, i32
  }
  func.func @transform_3(%arg0: i32, %arg1: i32) -> (i32, i32, i32) {
    %c0_i32 = arith.constant 0 : i32
    %c0_i32_0 = arith.constant 0 : i32
    %c0_i32_1 = arith.constant 0 : i32
    %c0_i32_2 = arith.constant 0 : i32
    return %c0_i32, %c0_i32_0, %c0_i32_1 : i32, i32, i32
  }
  func.func @transform_4(%arg0: i32, %arg1: i32) -> (i32, i32, i32) {
    %c0_i32 = arith.constant 0 : i32
    %c0_i32_0 = arith.constant 0 : i32
    %c0_i32_1 = arith.constant 0 : i32
    %c0_i32_2 = arith.constant 0 : i32
    return %c0_i32, %c0_i32_0, %c0_i32_1 : i32, i32, i32
  }
  func.func @transform_5(%arg0: i32, %arg1: i32) -> (i32, i32, i32) {
    %c0_i32 = arith.constant 0 : i32
    %c0_i32_0 = arith.constant 0 : i32
    %c0_i32_1 = arith.constant 0 : i32
    %c0_i32_2 = arith.constant 0 : i32
    return %c0_i32, %c0_i32_0, %c0_i32_1 : i32, i32, i32
  }
  func.func @transform_6(%arg0: i32, %arg1: i32) -> (i32, i32, i32) {
    %c0_i32 = arith.constant 0 : i32
    %c0_i32_0 = arith.constant 0 : i32
    %c0_i32_1 = arith.constant 0 : i32
    %c0_i32_2 = arith.constant 0 : i32
    return %c0_i32, %c0_i32_0, %c0_i32_1 : i32, i32, i32
  }
  func.func @transform_7(%arg0: i32, %arg1: i32) -> (i32, i32, i32) {
    %c0_i32 = arith.constant 0 : i32
    %c0_i32_0 = arith.constant 0 : i32
    %c0_i32_1 = arith.constant 0 : i32
    %c0_i32_2 = arith.constant 0 : i32
    return %c0_i32, %c0_i32_0, %c0_i32_1 : i32, i32, i32
  }
  func.func @transform_8(%arg0: i32, %arg1: i32) -> (i32, i32, i32) {
    %c0_i32 = arith.constant 0 : i32
    %c0_i32_0 = arith.constant 0 : i32
    %c0_i32_1 = arith.constant 0 : i32
    %c0_i32_2 = arith.constant 0 : i32
    return %c0_i32, %c0_i32_0, %c0_i32_1 : i32, i32, i32
  }
  func.func @transform_9(%arg0: i32, %arg1: i32) -> (i32, i32) {
    %c0_i32 = arith.constant 0 : i32
    %c0_i32_0 = arith.constant 0 : i32
    %c0_i32_1 = arith.constant 0 : i32
    return %c0_i32, %c0_i32_0 : i32, i32
  }
  func.func @transform_10(%arg0: i32, %arg1: i32) -> (i32, i32) {
    %c0_i32 = arith.constant 0 : i32
    %c0_i32_0 = arith.constant 0 : i32
    %c0_i32_1 = arith.constant 0 : i32
    return %c0_i32, %c0_i32_0 : i32, i32
  }
  func.func @transform_11(%arg0: i32, %arg1: i32) -> (i32, i32) {
    %c0_i32 = arith.constant 0 : i32
    %c0_i32_0 = arith.constant 0 : i32
    %c0_i32_1 = arith.constant 0 : i32
    return %c0_i32, %c0_i32_0 : i32, i32
  }
  func.func @transform_12(%arg0: i32, %arg1: i32) -> (i32, i32) {
    %c0_i32 = arith.constant 0 : i32
    %c0_i32_0 = arith.constant 0 : i32
    %c0_i32_1 = arith.constant 0 : i32
    return %c0_i32, %c0_i32_0 : i32, i32
  }
  func.func @transform_13(%arg0: i32, %arg1: i32) -> (i32, i32) {
    %c0_i32 = arith.constant 0 : i32
    %c0_i32_0 = arith.constant 0 : i32
    %c0_i32_1 = arith.constant 0 : i32
    return %c0_i32, %c0_i32_0 : i32, i32
  }
  func.func @transform_14(%arg0: i32, %arg1: i32) -> (i32, i32) {
    %c0_i32 = arith.constant 0 : i32
    %c0_i32_0 = arith.constant 0 : i32
    %c0_i32_1 = arith.constant 0 : i32
    return %c0_i32, %c0_i32_0 : i32, i32
  }
  func.func @transform_15(%arg0: i32, %arg1: i32) -> (i32, i32) {
    %c0_i32 = arith.constant 0 : i32
    %c0_i32_0 = arith.constant 0 : i32
    %c0_i32_1 = arith.constant 0 : i32
    return %c0_i32, %c0_i32_0 : i32, i32
  }
  func.func @transform_16(%arg0: i32, %arg1: i32) -> (i32, i32) {
    %c0_i32 = arith.constant 0 : i32
    %c0_i32_0 = arith.constant 0 : i32
    %c0_i32_1 = arith.constant 0 : i32
    return %c0_i32, %c0_i32_0 : i32, i32
  }
  func.func @transform_17(%arg0: i32, %arg1: i32) -> (i32, i32) {
    %c0_i32 = arith.constant 0 : i32
    %c0_i32_0 = arith.constant 0 : i32
    %c0_i32_1 = arith.constant 0 : i32
    return %c0_i32, %c0_i32_0 : i32, i32
  }
  func.func @transform_18(%arg0: i32, %arg1: i32) -> (i32, i32) {
    %c0_i32 = arith.constant 0 : i32
    %c0_i32_0 = arith.constant 0 : i32
    %c0_i32_1 = arith.constant 0 : i32
    return %c0_i32, %c0_i32_0 : i32, i32
  }
  func.func @transform_19(%arg0: i32, %arg1: i32) -> (i32, i32) {
    %c0_i32 = arith.constant 0 : i32
    %c0_i32_0 = arith.constant 0 : i32
    %c0_i32_1 = arith.constant 0 : i32
    return %c0_i32, %c0_i32_0 : i32, i32
  }
  func.func @transform_20(%arg0: i32, %arg1: i32) -> (i32, i32, i32) {
    %c0_i32 = arith.constant 0 : i32
    %c0_i32_0 = arith.constant 0 : i32
    return %arg0, %arg1, %c0_i32 : i32, i32, i32
  }
}

</mosaic_0001>

<llo_original>
// kernel: scaling_layer_forward.1
$region0: #{scaling_layer_forward.1}
  #allocation0 [shape = 'u32[]', space=smem, size = 0x4, offset = 0x4, fixed_abs, tag = 'smem constant byte address 0x4 - core index']
  #allocation1 [shape = 'u32[72,128]{1,0:T(1,128)}', space=vmem, size = 0x9000, scoped, tag = 'internal scratch']
  %s0 = inlined_call_operand.vmem [shape: f32[2,8,32], index: 0, kind: input, shape index: {}, may-alias: {0,1}]
  %s1 = inlined_call_operand.vmem [shape: f32[2,8,32], index: 1, kind: input, shape index: {}, may-alias: {0,1}]
  %s2 = inlined_call_operand.vmem [shape: bf16[4,32,8], index: 2, kind: input, shape index: {}]
  %s3 = inlined_call_operand.vmem [shape: f32[4,1,8], index: 3, kind: input, shape index: {}]
  %s4 = inlined_call_operand.vmem [shape: bf16[4,32,8], index: 4, kind: input, shape index: {}]
  %s5 = inlined_call_operand.vmem [shape: f32[4,1,8], index: 5, kind: input, shape index: {}]
  %s6 = inlined_call_operand.vmem [shape: bf16[4,32,8], index: 6, kind: input, shape index: {}]
  %s7 = inlined_call_operand.vmem [shape: f32[4,1,8], index: 7, kind: input, shape index: {}]
  %s8 = inlined_call_operand.vmem [shape: bf16[4,8,32], index: 8, kind: input, shape index: {}]
  %s9 = inlined_call_operand.vmem [shape: f32[1,32], index: 9, kind: input, shape index: {}]
  %s10 = inlined_call_operand.vmem [shape: f32[1,32], index: 10, kind: input, shape index: {}]
  %s11 = inlined_call_operand.vmem [shape: f32[1,32], index: 11, kind: input, shape index: {}]
  %s12 = inlined_call_operand.vmem [shape: bf16[32,64], index: 12, kind: input, shape index: {}]
  %s13 = inlined_call_operand.vmem [shape: f32[1,64], index: 13, kind: input, shape index: {}]
  %s14 = inlined_call_operand.vmem [shape: bf16[64,128], index: 14, kind: input, shape index: {}]
  %s15 = inlined_call_operand.vmem [shape: f32[1,128], index: 15, kind: input, shape index: {}]
  %s16 = inlined_call_operand.vmem [shape: bf16[32,128], index: 16, kind: input, shape index: {}]
  %s17 = inlined_call_operand.vmem [shape: f32[1,128], index: 17, kind: input, shape index: {}]
  %s18 = inlined_call_operand.vmem [shape: f32[1,128], index: 18, kind: input, shape index: {}]
  %s19 = inlined_call_operand.vmem [shape: f32[1,128], index: 19, kind: input, shape index: {}]
  %s20 = inlined_call_operand.hbm [shape: f32[2,8,128], index: 20, kind: output, shape index: {}]
  %s21 = sld [smem:[#allocation0]]
  $region113: #{scaling_layer_forward.1} parent=0
    _
  %s23 = ssub.s32 1, %s21
  %s24 = scalar_select 0, %s23, %s21
  $region1: #{scaling_layer_forward.1} parent=0
    #allocation2 [shape = 'u8[8192]{0}', space=vmem, size = 0x2000, scoped, tag = 'output window, operand 0']
    #allocation3 [shape = 's32[2]{0}', space=sflag, size = 0x8, scoped, tag = 'scoped memory for scaling_layer_forward.1']
    %25 = vsyncpa [#allocation3], 0
    %s26 = scalar_lea.sflag [#allocation3], 1
    %27 = vsyncpa %s26, 0
    loop: start=0, step=1, limit=4
    $region2: #{scaling_layer_forward.1} parent=1 // loop_pre_header
      _
    $region3: #{scaling_layer_forward.1} parent=1 // loop_header
      %s29 = sphi 0, %s33
      %p30 = scmp.ge.s32.totalorder %s29, 4
      %s36 = sphi 0, %s48
      %s37 = sphi 0, %s44
      %s38 = sphi 0, %s36
      %s39 = sphi 0, %s37
      %s40 = sphi 0, %s38
      %s41 = sphi 0, %s39
      %s53 = sphi 0, %s55
      %s56 = sphi 0, %s53
      %s57 = sphi 0, %s56
      %s73 = sphi 0, %s57
      %s79 = sphi 0, %s81
      %s82 = sphi 0, %s79
      %s83 = sphi 0, %s82
      %s99 = sphi 0, %s83
      %s103 = sphi 0, %s103
      %s105 = sphi 0, %s103
      %s106 = sphi 0, %s105
      %s120 = sphi 0, %s106
      %s124 = sphi 0, %s124
      %s126 = sphi 0, %s124
      %s127 = sphi 0, %s126
      %s141 = sphi 0, %s127
      %s145 = sphi 0, %s145
      %s147 = sphi 0, %s145
      %s148 = sphi 0, %s147
      %s162 = sphi 0, %s148
      %s166 = sphi 0, %s166
      %s168 = sphi 0, %s166
      %s169 = sphi 0, %s168
      %s183 = sphi 0, %s169
      %s187 = sphi 0, %s187
      %s189 = sphi 0, %s187
      %s190 = sphi 0, %s189
      %s204 = sphi 0, %s190
      %s208 = sphi 0, %s208
      %s210 = sphi 0, %s208
      %s211 = sphi 0, %s210
      %s225 = sphi 0, %s211
      %s229 = sphi 0, %s229
      %s231 = sphi 0, %s229
      %s232 = sphi 0, %s231
      %s246 = sphi 0, %s232
      %s250 = sphi 0, %s250
      %s252 = sphi 0, %s250
      %s253 = sphi 0, %s252
      %s267 = sphi 0, %s253
      %s271 = sphi 0, %s271
      %s273 = sphi 0, %s271
      %s274 = sphi 0, %s273
      %s288 = sphi 0, %s274
      %s292 = sphi 0, %s292
      %s294 = sphi 0, %s292
      %s295 = sphi 0, %s294
      %s309 = sphi 0, %s295
      %s313 = sphi 0, %s313
      %s315 = sphi 0, %s313
      %s316 = sphi 0, %s315
      %s330 = sphi 0, %s316
      %s334 = sphi 0, %s334
      %s336 = sphi 0, %s334
      %s337 = sphi 0, %s336
      %s351 = sphi 0, %s337
      %s355 = sphi 0, %s355
      %s357 = sphi 0, %s355
      %s358 = sphi 0, %s357
      %s372 = sphi 0, %s358
      %s376 = sphi 0, %s376
      %s378 = sphi 0, %s376
      %s379 = sphi 0, %s378
      %s393 = sphi 0, %s379
      %s397 = sphi 0, %s397
      %s399 = sphi 0, %s397
      %s400 = sphi 0, %s399
      %s414 = sphi 0, %s400
      %s418 = sphi 0, %s418
      %s420 = sphi 0, %s418
      %s421 = sphi 0, %s420
      %s435 = sphi 0, %s421
      %s439 = sphi 0, %s439
      %s441 = sphi 0, %s439
      %s442 = sphi 0, %s441
      %s456 = sphi 0, %s442
      %s460 = sphi 0, %s460
      %s462 = sphi 0, %s460
      %s463 = sphi 0, %s462
      %s477 = sphi 0, %s463
      %s485 = sphi 0, %s487
      %s488 = sphi 0, %s485
      %s489 = sphi 0, %s488
      %s505 = sphi 0, %s489
    $region4: #{scaling_layer_forward.1} parent=1 // loop_header_branch
      %32 = sbr.rel (%p30) target = $region8
    $region5: #{scaling_layer_forward.1} parent=1 // loop_body
      %s34 = ssub.s32 %s29, 1
      %s35 = ssub.s32 %s29, 2
      %s42 = sadd.s32 1, %s37
      %p43 = scmp.ge.s32.totalorder %s42, 1
      %s44 = scalar_select %p43, 0, %s42
      %s45 = sadd.s32 1, %s36
      %s46 = scalar_select %p43, %s45, %s36
      %p47 = scmp.ge.s32.totalorder %s46, 2
      %s48 = scalar_select %p47, 0, %s46
      %s49 = ssub.s32 %s36, %s48
      %s50 = ssub.s32 %s37, %s44
      %s51 = sor.u32 %s49, %s50
      %p52 = scmp.eq.s32.totalorder %s51, 0
      %s54 = sadd.s32 %s53, 1
      %s55 = scalar_select %p52, %s53, %s54
      %p58 = pneg %p52
      %p59 = scmp.eq.s32.totalorder %s29, 1
      %p60 = por %p58, %p59
      %p61 = scmp.ne.s32.totalorder %s53, %s56
      %p62 = scmp.eq.s32.totalorder %s29, 0
      %p63 = por %p61, %p62
      %p64 = scmp.ne.s32.totalorder %s53, %s56
      %p65 = scmp.eq.s32.totalorder %s34, 1
      %p66 = por %p64, %p65
      %p67 = scmp.ne.s32.totalorder %s56, %s57
      %p68 = scmp.eq.s32.totalorder %s34, 0
      %p69 = por %p67, %p68
      %p70 = scmp.ne.s32.totalorder %s56, %s57
      %p71 = scmp.eq.s32.totalorder %s35, 1
      %p72 = por %p70, %p71
      %p74 = scmp.ne.s32.totalorder %s57, %s73
      %p75 = scmp.eq.s32.totalorder %s35, 0
      %p76 = por %p74, %p75
      %s77 = ssub.s32 %s36, %s48
      %p78 = scmp.eq.s32.totalorder %s77, 0
      %s80 = sadd.s32 %s79, 1
      %s81 = scalar_select %p78, %s79, %s80
      %p84 = pneg %p78
      %p85 = scmp.eq.s32.totalorder %s29, 1
      %p86 = por %p84, %p85
      %p87 = scmp.ne.s32.totalorder %s79, %s82
      %p88 = scmp.eq.s32.totalorder %s29, 0
      %p89 = por %p87, %p88
      %p90 = scmp.ne.s32.totalorder %s79, %s82
      %p91 = scmp.eq.s32.totalorder %s34, 1
      %p92 = por %p90, %p91
      %p93 = scmp.ne.s32.totalorder %s82, %s83
      %p94 = scmp.eq.s32.totalorder %s34, 0
      %p95 = por %p93, %p94
      %p96 = scmp.ne.s32.totalorder %s82, %s83
      %p97 = scmp.eq.s32.totalorder %s35, 1
      %p98 = por %p96, %p97
      %p100 = scmp.ne.s32.totalorder %s83, %s99
      %p101 = scmp.eq.s32.totalorder %s35, 0
      %p102 = por %p100, %p101
      %s104 = sadd.s32 %s103, 1
      %p107 = scmp.eq.s32.totalorder %s29, 1
      %p108 = scmp.ne.s32.totalorder %s103, %s105
      %p109 = scmp.eq.s32.totalorder %s29, 0
      %p110 = por %p108, %p109
      %p111 = scmp.ne.s32.totalorder %s103, %s105
      %p112 = scmp.eq.s32.totalorder %s34, 1
      %p113 = por %p111, %p112
      %p114 = scmp.ne.s32.totalorder %s105, %s106
      %p115 = scmp.eq.s32.totalorder %s34, 0
      %p116 = por %p114, %p115
      %p117 = scmp.ne.s32.totalorder %s105, %s106
      %p118 = scmp.eq.s32.totalorder %s35, 1
      %p119 = por %p117, %p118
      %p121 = scmp.ne.s32.totalorder %s106, %s120
      %p122 = scmp.eq.s32.totalorder %s35, 0
      %p123 = por %p121, %p122
      %s125 = sadd.s32 %s124, 1
      %p128 = scmp.eq.s32.totalorder %s29, 1
      %p129 = scmp.ne.s32.totalorder %s124, %s126
      %p130 = scmp.eq.s32.totalorder %s29, 0
      %p131 = por %p129, %p130
      %p132 = scmp.ne.s32.totalorder %s124, %s126
      %p133 = scmp.eq.s32.totalorder %s34, 1
      %p134 = por %p132, %p133
      %p135 = scmp.ne.s32.totalorder %s126, %s127
      %p136 = scmp.eq.s32.totalorder %s34, 0
      %p137 = por %p135, %p136
      %p138 = scmp.ne.s32.totalorder %s126, %s127
      %p139 = scmp.eq.s32.totalorder %s35, 1
      %p140 = por %p138, %p139
      %p142 = scmp.ne.s32.totalorder %s127, %s141
      %p143 = scmp.eq.s32.totalorder %s35, 0
      %p144 = por %p142, %p143
      %s146 = sadd.s32 %s145, 1
      %p149 = scmp.eq.s32.totalorder %s29, 1
      %p150 = scmp.ne.s32.totalorder %s145, %s147
      %p151 = scmp.eq.s32.totalorder %s29, 0
      %p152 = por %p150, %p151
      %p153 = scmp.ne.s32.totalorder %s145, %s147
      %p154 = scmp.eq.s32.totalorder %s34, 1
      %p155 = por %p153, %p154
      %p156 = scmp.ne.s32.totalorder %s147, %s148
      %p157 = scmp.eq.s32.totalorder %s34, 0
      %p158 = por %p156, %p157
      %p159 = scmp.ne.s32.totalorder %s147, %s148
      %p160 = scmp.eq.s32.totalorder %s35, 1
      %p161 = por %p159, %p160
      %p163 = scmp.ne.s32.totalorder %s148, %s162
      %p164 = scmp.eq.s32.totalorder %s35, 0
      %p165 = por %p163, %p164
      %s167 = sadd.s32 %s166, 1
      %p170 = scmp.eq.s32.totalorder %s29, 1
      %p171 = scmp.ne.s32.totalorder %s166, %s168
      %p172 = scmp.eq.s32.totalorder %s29, 0
      %p173 = por %p171, %p172
      %p174 = scmp.ne.s32.totalorder %s166, %s168
      %p175 = scmp.eq.s32.totalorder %s34, 1
      %p176 = por %p174, %p175
      %p177 = scmp.ne.s32.totalorder %s168, %s169
      %p178 = scmp.eq.s32.totalorder %s34, 0
      %p179 = por %p177, %p178
      %p180 = scmp.ne.s32.totalorder %s168, %s169
      %p181 = scmp.eq.s32.totalorder %s35, 1
      %p182 = por %p180, %p181
      %p184 = scmp.ne.s32.totalorder %s169, %s183
      %p185 = scmp.eq.s32.totalorder %s35, 0
      %p186 = por %p184, %p185
      %s188 = sadd.s32 %s187, 1
      %p191 = scmp.eq.s32.totalorder %s29, 1
      %p192 = scmp.ne.s32.totalorder %s187, %s189
      %p193 = scmp.eq.s32.totalorder %s29, 0
      %p194 = por %p192, %p193
      %p195 = scmp.ne.s32.totalorder %s187, %s189
      %p196 = scmp.eq.s32.totalorder %s34, 1
      %p197 = por %p195, %p196
      %p198 = scmp.ne.s32.totalorder %s189, %s190
      %p199 = scmp.eq.s32.totalorder %s34, 0
      %p200 = por %p198, %p199
      %p201 = scmp.ne.s32.totalorder %s189, %s190
      %p202 = scmp.eq.s32.totalorder %s35, 1
      %p203 = por %p201, %p202
      %p205 = scmp.ne.s32.totalorder %s190, %s204
      %p206 = scmp.eq.s32.totalorder %s35, 0
      %p207 = por %p205, %p206
      %s209 = sadd.s32 %s208, 1
      %p212 = scmp.eq.s32.totalorder %s29, 1
      %p213 = scmp.ne.s32.totalorder %s208, %s210
      %p214 = scmp.eq.s32.totalorder %s29, 0
      %p215 = por %p213, %p214
      %p216 = scmp.ne.s32.totalorder %s208, %s210
      %p217 = scmp.eq.s32.totalorder %s34, 1
      %p218 = por %p216, %p217
      %p219 = scmp.ne.s32.totalorder %s210, %s211
      %p220 = scmp.eq.s32.totalorder %s34, 0
      %p221 = por %p219, %p220
      %p222 = scmp.ne.s32.totalorder %s210, %s211
      %p223 = scmp.eq.s32.totalorder %s35, 1
      %p224 = por %p222, %p223
      %p226 = scmp.ne.s32.totalorder %s211, %s225
      %p227 = scmp.eq.s32.totalorder %s35, 0
      %p228 = por %p226, %p227
      %s230 = sadd.s32 %s229, 1
      %p233 = scmp.eq.s32.totalorder %s29, 1
      %p234 = scmp.ne.s32.totalorder %s229, %s231
      %p235 = scmp.eq.s32.totalorder %s29, 0
      %p236 = por %p234, %p235
      %p237 = scmp.ne.s32.totalorder %s229, %s231
      %p238 = scmp.eq.s32.totalorder %s34, 1
      %p239 = por %p237, %p238
      %p240 = scmp.ne.s32.totalorder %s231, %s232
      %p241 = scmp.eq.s32.totalorder %s34, 0
      %p242 = por %p240, %p241
      %p243 = scmp.ne.s32.totalorder %s231, %s232
      %p244 = scmp.eq.s32.totalorder %s35, 1
      %p245 = por %p243, %p244
      %p247 = scmp.ne.s32.totalorder %s232, %s246
      %p248 = scmp.eq.s32.totalorder %s35, 0
      %p249 = por %p247, %p248
      %s251 = sadd.s32 %s250, 1
      %p254 = scmp.eq.s32.totalorder %s29, 1
      %p255 = scmp.ne.s32.totalorder %s250, %s252
      %p256 = scmp.eq.s32.totalorder %s29, 0
      %p257 = por %p255, %p256
      %p258 = scmp.ne.s32.totalorder %s250, %s252
      %p259 = scmp.eq.s32.totalorder %s34, 1
      %p260 = por %p258, %p259
      %p261 = scmp.ne.s32.totalorder %s252, %s253
      %p262 = scmp.eq.s32.totalorder %s34, 0
      %p263 = por %p261, %p262
      %p264 = scmp.ne.s32.totalorder %s252, %s253
      %p265 = scmp.eq.s32.totalorder %s35, 1
      %p266 = por %p264, %p265
      %p268 = scmp.ne.s32.totalorder %s253, %s267
      %p269 = scmp.eq.s32.totalorder %s35, 0
      %p270 = por %p268, %p269
      %s272 = sadd.s32 %s271, 1
      %p275 = scmp.eq.s32.totalorder %s29, 1
      %p276 = scmp.ne.s32.totalorder %s271, %s273
      %p277 = scmp.eq.s32.totalorder %s29, 0
      %p278 = por %p276, %p277
      %p279 = scmp.ne.s32.totalorder %s271, %s273
      %p280 = scmp.eq.s32.totalorder %s34, 1
      %p281 = por %p279, %p280
      %p282 = scmp.ne.s32.totalorder %s273, %s274
      %p283 = scmp.eq.s32.totalorder %s34, 0
      %p284 = por %p282, %p283
      %p285 = scmp.ne.s32.totalorder %s273, %s274
      %p286 = scmp.eq.s32.totalorder %s35, 1
      %p287 = por %p285, %p286
      %p289 = scmp.ne.s32.totalorder %s274, %s288
      %p290 = scmp.eq.s32.totalorder %s35, 0
      %p291 = por %p289, %p290
      %s293 = sadd.s32 %s292, 1
      %p296 = scmp.eq.s32.totalorder %s29, 1
      %p297 = scmp.ne.s32.totalorder %s292, %s294
      %p298 = scmp.eq.s32.totalorder %s29, 0
      %p299 = por %p297, %p298
      %p300 = scmp.ne.s32.totalorder %s292, %s294
      %p301 = scmp.eq.s32.totalorder %s34, 1
      %p302 = por %p300, %p301
      %p303 = scmp.ne.s32.totalorder %s294, %s295
      %p304 = scmp.eq.s32.totalorder %s34, 0
      %p305 = por %p303, %p304
      %p306 = scmp.ne.s32.totalorder %s294, %s295
      %p307 = scmp.eq.s32.totalorder %s35, 1
      %p308 = por %p306, %p307
      %p310 = scmp.ne.s32.totalorder %s295, %s309
      %p311 = scmp.eq.s32.totalorder %s35, 0
      %p312 = por %p310, %p311
      %s314 = sadd.s32 %s313, 1
      %p317 = scmp.eq.s32.totalorder %s29, 1
      %p318 = scmp.ne.s32.totalorder %s313, %s315
      %p319 = scmp.eq.s32.totalorder %s29, 0
      %p320 = por %p318, %p319
      %p321 = scmp.ne.s32.totalorder %s313, %s315
      %p322 = scmp.eq.s32.totalorder %s34, 1
      %p323 = por %p321, %p322
      %p324 = scmp.ne.s32.totalorder %s315, %s316
      %p325 = scmp.eq.s32.totalorder %s34, 0
      %p326 = por %p324, %p325
      %p327 = scmp.ne.s32.totalorder %s315, %s316
      %p328 = scmp.eq.s32.totalorder %s35, 1
      %p329 = por %p327, %p328
      %p331 = scmp.ne.s32.totalorder %s316, %s330
      %p332 = scmp.eq.s32.totalorder %s35, 0
      %p333 = por %p331, %p332
      %s335 = sadd.s32 %s334, 1
      %p338 = scmp.eq.s32.totalorder %s29, 1
      %p339 = scmp.ne.s32.totalorder %s334, %s336
      %p340 = scmp.eq.s32.totalorder %s29, 0
      %p341 = por %p339, %p340
      %p342 = scmp.ne.s32.totalorder %s334, %s336
      %p343 = scmp.eq.s32.totalorder %s34, 1
      %p344 = por %p342, %p343
      %p345 = scmp.ne.s32.totalorder %s336, %s337
      %p346 = scmp.eq.s32.totalorder %s34, 0
      %p347 = por %p345, %p346
      %p348 = scmp.ne.s32.totalorder %s336, %s337
      %p349 = scmp.eq.s32.totalorder %s35, 1
      %p350 = por %p348, %p349
      %p352 = scmp.ne.s32.totalorder %s337, %s351
      %p353 = scmp.eq.s32.totalorder %s35, 0
      %p354 = por %p352, %p353
      %s356 = sadd.s32 %s355, 1
      %p359 = scmp.eq.s32.totalorder %s29, 1
      %p360 = scmp.ne.s32.totalorder %s355, %s357
      %p361 = scmp.eq.s32.totalorder %s29, 0
      %p362 = por %p360, %p361
      %p363 = scmp.ne.s32.totalorder %s355, %s357
      %p364 = scmp.eq.s32.totalorder %s34, 1
      %p365 = por %p363, %p364
      %p366 = scmp.ne.s32.totalorder %s357, %s358
      %p367 = scmp.eq.s32.totalorder %s34, 0
      %p368 = por %p366, %p367
      %p369 = scmp.ne.s32.totalorder %s357, %s358
      %p370 = scmp.eq.s32.totalorder %s35, 1
      %p371 = por %p369, %p370
      %p373 = scmp.ne.s32.totalorder %s358, %s372
      %p374 = scmp.eq.s32.totalorder %s35, 0
      %p375 = por %p373, %p374
      %s377 = sadd.s32 %s376, 1
      %p380 = scmp.eq.s32.totalorder %s29, 1
      %p381 = scmp.ne.s32.totalorder %s376, %s378
      %p382 = scmp.eq.s32.totalorder %s29, 0
      %p383 = por %p381, %p382
      %p384 = scmp.ne.s32.totalorder %s376, %s378
      %p385 = scmp.eq.s32.totalorder %s34, 1
      %p386 = por %p384, %p385
      %p387 = scmp.ne.s32.totalorder %s378, %s379
      %p388 = scmp.eq.s32.totalorder %s34, 0
      %p389 = por %p387, %p388
      %p390 = scmp.ne.s32.totalorder %s378, %s379
      %p391 = scmp.eq.s32.totalorder %s35, 1
      %p392 = por %p390, %p391
      %p394 = scmp.ne.s32.totalorder %s379, %s393
      %p395 = scmp.eq.s32.totalorder %s35, 0
      %p396 = por %p394, %p395
      %s398 = sadd.s32 %s397, 1
      %p401 = scmp.eq.s32.totalorder %s29, 1
      %p402 = scmp.ne.s32.totalorder %s397, %s399
      %p403 = scmp.eq.s32.totalorder %s29, 0
      %p404 = por %p402, %p403
      %p405 = scmp.ne.s32.totalorder %s397, %s399
      %p406 = scmp.eq.s32.totalorder %s34, 1
      %p407 = por %p405, %p406
      %p408 = scmp.ne.s32.totalorder %s399, %s400
      %p409 = scmp.eq.s32.totalorder %s34, 0
      %p410 = por %p408, %p409
      %p411 = scmp.ne.s32.totalorder %s399, %s400
      %p412 = scmp.eq.s32.totalorder %s35, 1
      %p413 = por %p411, %p412
      %p415 = scmp.ne.s32.totalorder %s400, %s414
      %p416 = scmp.eq.s32.totalorder %s35, 0
      %p417 = por %p415, %p416
      %s419 = sadd.s32 %s418, 1
      %p422 = scmp.eq.s32.totalorder %s29, 1
      %p423 = scmp.ne.s32.totalorder %s418, %s420
      %p424 = scmp.eq.s32.totalorder %s29, 0
      %p425 = por %p423, %p424
      %p426 = scmp.ne.s32.totalorder %s418, %s420
      %p427 = scmp.eq.s32.totalorder %s34, 1
      %p428 = por %p426, %p427
      %p429 = scmp.ne.s32.totalorder %s420, %s421
      %p430 = scmp.eq.s32.totalorder %s34, 0
      %p431 = por %p429, %p430
      %p432 = scmp.ne.s32.totalorder %s420, %s421
      %p433 = scmp.eq.s32.totalorder %s35, 1
      %p434 = por %p432, %p433
      %p436 = scmp.ne.s32.totalorder %s421, %s435
      %p437 = scmp.eq.s32.totalorder %s35, 0
      %p438 = por %p436, %p437
      %s440 = sadd.s32 %s439, 1
      %p443 = scmp.eq.s32.totalorder %s29, 1
      %p444 = scmp.ne.s32.totalorder %s439, %s441
      %p445 = scmp.eq.s32.totalorder %s29, 0
      %p446 = por %p444, %p445
      %p447 = scmp.ne.s32.totalorder %s439, %s441
      %p448 = scmp.eq.s32.totalorder %s34, 1
      %p449 = por %p447, %p448
      %p450 = scmp.ne.s32.totalorder %s441, %s442
      %p451 = scmp.eq.s32.totalorder %s34, 0
      %p452 = por %p450, %p451
      %p453 = scmp.ne.s32.totalorder %s441, %s442
      %p454 = scmp.eq.s32.totalorder %s35, 1
      %p455 = por %p453, %p454
      %p457 = scmp.ne.s32.totalorder %s442, %s456
      %p458 = scmp.eq.s32.totalorder %s35, 0
      %p459 = por %p457, %p458
      %s461 = sadd.s32 %s460, 1
      %p464 = scmp.eq.s32.totalorder %s29, 1
      %p465 = scmp.ne.s32.totalorder %s460, %s462
      %p466 = scmp.eq.s32.totalorder %s29, 0
      %p467 = por %p465, %p466
      %p468 = scmp.ne.s32.totalorder %s460, %s462
      %p469 = scmp.eq.s32.totalorder %s34, 1
      %p470 = por %p468, %p469
      %p471 = scmp.ne.s32.totalorder %s462, %s463
      %p472 = scmp.eq.s32.totalorder %s34, 0
      %p473 = por %p471, %p472
      %p474 = scmp.ne.s32.totalorder %s462, %s463
      %p475 = scmp.eq.s32.totalorder %s35, 1
      %p476 = por %p474, %p475
      %p478 = scmp.ne.s32.totalorder %s463, %s477
      %p479 = scmp.eq.s32.totalorder %s35, 0
      %p480 = por %p478, %p479
      %s481 = ssub.s32 %s36, %s48
      %s482 = ssub.s32 %s37, %s44
      %s483 = sor.u32 %s481, %s482
      %p484 = scmp.eq.s32.totalorder %s483, 0
      %s486 = sadd.s32 %s485, 1
      %s487 = scalar_select %p484, %s485, %s486
      %p490 = pneg %p484
      %p491 = scmp.eq.s32.totalorder %s29, 1
      %p492 = por %p490, %p491
      %p493 = scmp.ne.s32.totalorder %s485, %s488
      %p494 = scmp.eq.s32.totalorder %s29, 0
      %p495 = por %p493, %p494
      %p496 = scmp.ne.s32.totalorder %s485, %s488
      %p497 = scmp.eq.s32.totalorder %s34, 1
      %p498 = por %p496, %p497
      %p499 = scmp.ne.s32.totalorder %s488, %s489
      %p500 = scmp.eq.s32.totalorder %s34, 0
      %p501 = por %p499, %p500
      %p502 = scmp.ne.s32.totalorder %s488, %s489
      %p503 = scmp.eq.s32.totalorder %s35, 1
      %p504 = por %p502, %p503
      %p506 = scmp.ne.s32.totalorder %s489, %s505
      %p507 = scmp.eq.s32.totalorder %s35, 0
      %p508 = por %p506, %p507
      %p509 = scmp.le.s32.totalorder 1, %s29
      %p510 = scmp.lt.s32.totalorder %s29, 3
      %p511 = pnand %p509, %p510
      %p512 = pneg %p511
      // Predicated region
      $region9: #{scaling_layer_forward.1} parent=5 // pred_check
        _
      $region10: #{scaling_layer_forward.1} parent=5 // pred_check_branch
        %514 = sbr.rel (%p511) target = $region12
      $region11: #{scaling_layer_forward.1} parent=5 // pred_region
        %s515 = ssub.s32 %s29, 1
        // Predicated region
        $region13: #{scaling_layer_forward.1} parent=11 // pred_check
          %p516 = pneg %p116
        $region14: #{scaling_layer_forward.1} parent=11 // pred_check_branch
          %518 = sbr.rel (%p516) target = $region16
        $region15: #{scaling_layer_forward.1} parent=11 // pred_region
          _
        $region16: #{scaling_layer_forward.1} parent=11 // pred_fallthru
          _
        // Predicated region
        $region17: #{scaling_layer_forward.1} parent=11 // pred_check
          %p519 = pneg %p137
        $region18: #{scaling_layer_forward.1} parent=11 // pred_check_branch
          %521 = sbr.rel (%p519) target = $region20
        $region19: #{scaling_layer_forward.1} parent=11 // pred_region
          _
        $region20: #{scaling_layer_forward.1} parent=11 // pred_fallthru
          _
        // Predicated region
        $region21: #{scaling_layer_forward.1} parent=11 // pred_check
          %p522 = pneg %p158
        $region22: #{scaling_layer_forward.1} parent=11 // pred_check_branch
          %524 = sbr.rel (%p522) target = $region24
        $region23: #{scaling_layer_forward.1} parent=11 // pred_region
          _
        $region24: #{scaling_layer_forward.1} parent=11 // pred_fallthru
          _
        // Predicated region
        $region25: #{scaling_layer_forward.1} parent=11 // pred_check
          %p525 = pneg %p179
        $region26: #{scaling_layer_forward.1} parent=11 // pred_check_branch
          %527 = sbr.rel (%p525) target = $region28
        $region27: #{scaling_layer_forward.1} parent=11 // pred_region
          _
        $region28: #{scaling_layer_forward.1} parent=11 // pred_fallthru
          _
        // Predicated region
        $region29: #{scaling_layer_forward.1} parent=11 // pred_check
          %p528 = pneg %p200
        $region30: #{scaling_layer_forward.1} parent=11 // pred_check_branch
          %530 = sbr.rel (%p528) target = $region32
        $region31: #{scaling_layer_forward.1} parent=11 // pred_region
          _
        $region32: #{scaling_layer_forward.1} parent=11 // pred_fallthru
          _
        // Predicated region
        $region33: #{scaling_layer_forward.1} parent=11 // pred_check
          %p531 = pneg %p221
        $region34: #{scaling_layer_forward.1} parent=11 // pred_check_branch
          %533 = sbr.rel (%p531) target = $region36
        $region35: #{scaling_layer_forward.1} parent=11 // pred_region
          _
        $region36: #{scaling_layer_forward.1} parent=11 // pred_fallthru
          _
        // Predicated region
        $region37: #{scaling_layer_forward.1} parent=11 // pred_check
          %p534 = pneg %p242
        $region38: #{scaling_layer_forward.1} parent=11 // pred_check_branch
          %536 = sbr.rel (%p534) target = $region40
        $region39: #{scaling_layer_forward.1} parent=11 // pred_region
          _
        $region40: #{scaling_layer_forward.1} parent=11 // pred_fallthru
          _
        // Predicated region
        $region41: #{scaling_layer_forward.1} parent=11 // pred_check
          %p537 = pneg %p263
        $region42: #{scaling_layer_forward.1} parent=11 // pred_check_branch
          %539 = sbr.rel (%p537) target = $region44
        $region43: #{scaling_layer_forward.1} parent=11 // pred_region
          _
        $region44: #{scaling_layer_forward.1} parent=11 // pred_fallthru
          _
        // Predicated region
        $region45: #{scaling_layer_forward.1} parent=11 // pred_check
          %p540 = pneg %p284
        $region46: #{scaling_layer_forward.1} parent=11 // pred_check_branch
          %542 = sbr.rel (%p540) target = $region48
        $region47: #{scaling_layer_forward.1} parent=11 // pred_region
          _
        $region48: #{scaling_layer_forward.1} parent=11 // pred_fallthru
          _
        // Predicated region
        $region49: #{scaling_layer_forward.1} parent=11 // pred_check
          %p543 = pneg %p305
        $region50: #{scaling_layer_forward.1} parent=11 // pred_check_branch
          %545 = sbr.rel (%p543) target = $region52
        $region51: #{scaling_layer_forward.1} parent=11 // pred_region
          _
        $region52: #{scaling_layer_forward.1} parent=11 // pred_fallthru
          _
        // Predicated region
        $region53: #{scaling_layer_forward.1} parent=11 // pred_check
          %p546 = pneg %p326
        $region54: #{scaling_layer_forward.1} parent=11 // pred_check_branch
          %548 = sbr.rel (%p546) target = $region56
        $region55: #{scaling_layer_forward.1} parent=11 // pred_region
          _
        $region56: #{scaling_layer_forward.1} parent=11 // pred_fallthru
          _
        // Predicated region
        $region57: #{scaling_layer_forward.1} parent=11 // pred_check
          %p549 = pneg %p347
        $region58: #{scaling_layer_forward.1} parent=11 // pred_check_branch
          %551 = sbr.rel (%p549) target = $region60
        $region59: #{scaling_layer_forward.1} parent=11 // pred_region
          _
        $region60: #{scaling_layer_forward.1} parent=11 // pred_fallthru
          _
        // Predicated region
        $region61: #{scaling_layer_forward.1} parent=11 // pred_check
          %p552 = pneg %p368
        $region62: #{scaling_layer_forward.1} parent=11 // pred_check_branch
          %554 = sbr.rel (%p552) target = $region64
        $region63: #{scaling_layer_forward.1} parent=11 // pred_region
          _
        $region64: #{scaling_layer_forward.1} parent=11 // pred_fallthru
          _
        // Predicated region
        $region65: #{scaling_layer_forward.1} parent=11 // pred_check
          %p555 = pneg %p389
        $region66: #{scaling_layer_forward.1} parent=11 // pred_check_branch
          %557 = sbr.rel (%p555) target = $region68
        $region67: #{scaling_layer_forward.1} parent=11 // pred_region
          _
        $region68: #{scaling_layer_forward.1} parent=11 // pred_fallthru
          _
        // Predicated region
        $region69: #{scaling_layer_forward.1} parent=11 // pred_check
          %p558 = pneg %p410
        $region70: #{scaling_layer_forward.1} parent=11 // pred_check_branch
          %560 = sbr.rel (%p558) target = $region72
        $region71: #{scaling_layer_forward.1} parent=11 // pred_region
          _
        $region72: #{scaling_layer_forward.1} parent=11 // pred_fallthru
          _
        // Predicated region
        $region73: #{scaling_layer_forward.1} parent=11 // pred_check
          %p561 = pneg %p431
        $region74: #{scaling_layer_forward.1} parent=11 // pred_check_branch
          %563 = sbr.rel (%p561) target = $region76
        $region75: #{scaling_layer_forward.1} parent=11 // pred_region
          _
        $region76: #{scaling_layer_forward.1} parent=11 // pred_fallthru
          _
        // Predicated region
        $region77: #{scaling_layer_forward.1} parent=11 // pred_check
          %p564 = pneg %p452
        $region78: #{scaling_layer_forward.1} parent=11 // pred_check_branch
          %566 = sbr.rel (%p564) target = $region80
        $region79: #{scaling_layer_forward.1} parent=11 // pred_region
          _
        $region80: #{scaling_layer_forward.1} parent=11 // pred_fallthru
          _
        // Predicated region
        $region81: #{scaling_layer_forward.1} parent=11 // pred_check
          %p567 = pneg %p473
        $region82: #{scaling_layer_forward.1} parent=11 // pred_check_branch
          %569 = sbr.rel (%p567) target = $region84
        $region83: #{scaling_layer_forward.1} parent=11 // pred_region
          _
        $region84: #{scaling_layer_forward.1} parent=11 // pred_fallthru
          _
      $region12: #{scaling_layer_forward.1} parent=5 // pred_fallthru
        _
      %p570 = scmp.lt.s32.totalorder %s29, 2
      // Predicated region
      $region85: #{scaling_layer_forward.1} parent=5 // pred_check
        %p571 = pneg %p570
      $region86: #{scaling_layer_forward.1} parent=5 // pred_check_branch
        %573 = sbr.rel (%p571) target = $region88
      $region87: #{scaling_layer_forward.1} parent=5 // pred_region
        // Predicated region
        $region89: #{scaling_layer_forward.1} parent=87 // pred_check
          %p574 = pneg %p63
        $region90: #{scaling_layer_forward.1} parent=87 // pred_check_branch
          %576 = sbr.rel (%p574) target = $region92
        $region91: #{scaling_layer_forward.1} parent=87 // pred_region
          %p577 = scmp.lt.s32.totalorder %s36, 1
          %s578 = scalar_select %p577, %s36, 1
          %p579 = scmp.lt.s32.totalorder %s37, 0
          %s580 = scalar_select %p579, %s37, 0
          %s581 = sadd.s32 %s580, %s578
          %s582 = smul.addr %s581, 8
          %s583 = scalar_lea.vmem %s0, %s582
        $region92: #{scaling_layer_forward.1} parent=87 // pred_fallthru
          _
        // Predicated region
        $region93: #{scaling_layer_forward.1} parent=87 // pred_check
          %p584 = pneg %p89
        $region94: #{scaling_layer_forward.1} parent=87 // pred_check_branch
          %586 = sbr.rel (%p584) target = $region96
        $region95: #{scaling_layer_forward.1} parent=87 // pred_region
          %p587 = scmp.lt.s32.totalorder %s36, 1
          %s588 = scalar_select %p587, %s36, 1
          %s589 = smul.addr %s588, 8
          %s590 = scalar_lea.vmem %s1, %s589
        $region96: #{scaling_layer_forward.1} parent=87 // pred_fallthru
          _
      $region88: #{scaling_layer_forward.1} parent=5 // pred_fallthru
        _
      %p591 = scmp.le.s32.totalorder 1, %s29
      %p592 = scmp.lt.s32.totalorder %s29, 3
      %p593 = pnand %p591, %p592
      %p594 = pneg %p593
      // Predicated region
      $region97: #{scaling_layer_forward.1} parent=5 // pred_check
        _
      $region98: #{scaling_layer_forward.1} parent=5 // pred_check_branch
        %596 = sbr.rel (%p593) target = $region100
      $region99: #{scaling_layer_forward.1} parent=5 // pred_region
        %s597 = ssub.s32 %s29, 1
        %p598 = scmp.lt.s32.totalorder %s38, 1
        %s599 = scalar_select %p598, %s38, 1
        %p600 = scmp.lt.s32.totalorder %s39, 0
        %s601 = scalar_select %p600, %s39, 0
        %s602 = sadd.s32 %s601, %s599
        %s603 = smul.addr %s602, 8
        %s604 = scalar_lea.vmem %s0, %s603
        %p605 = pneg %p69
        %p606 = pneg %p66
        %p607 = scmp.lt.s32.totalorder %s38, 1
        %s608 = scalar_select %p607, %s38, 1
        %s609 = smul.addr %s608, 8
        %s610 = scalar_lea.vmem %s1, %s609
        %p611 = pneg %p95
        %p612 = pneg %p92
        %p613 = pneg %p116
        %p614 = pneg %p113
        %p615 = pneg %p137
        %p616 = pneg %p134
        %p617 = pneg %p158
        %p618 = pneg %p155
        %p619 = pneg %p179
        %p620 = pneg %p176
        %p621 = pneg %p200
        %p622 = pneg %p197
        %p623 = pneg %p221
        %p624 = pneg %p218
        %p625 = pneg %p242
        %p626 = pneg %p239
        %p627 = pneg %p263
        %p628 = pneg %p260
        %p629 = pneg %p284
        %p630 = pneg %p281
        %p631 = pneg %p305
        %p632 = pneg %p302
        %p633 = pneg %p326
        %p634 = pneg %p323
        %p635 = pneg %p347
        %p636 = pneg %p344
        %p637 = pneg %p368
        %p638 = pneg %p365
        %p639 = pneg %p389
        %p640 = pneg %p386
        %p641 = pneg %p410
        %p642 = pneg %p407
        %p643 = pneg %p431
        %p644 = pneg %p428
        %p645 = pneg %p452
        %p646 = pneg %p449
        %p647 = pneg %p473
        %p648 = pneg %p470
        %p649 = pneg %p501
        %p650 = pneg %p498
        %s651 = sand.u32 %s488, 1
        %s652 = scalar_lea.sflag [#allocation3], %s651
        %s653 = sand.u32 %s488, 1
        %s654 = smul.addr %s653, 8
        %s655 = scalar_lea.vmem [#allocation2], %s654
        %p656 = scmp.lt.s32.totalorder %s38, 1
        %s657 = scalar_select %p656, %s38, 1
        %p658 = scmp.lt.s32.totalorder %s39, 0
        %s659 = scalar_select %p658, %s39, 0
        %s660 = sadd.s32 %s659, %s657
        %s661 = smul.addr %s660, 8
        %s662 = scalar_lea.vmem %s0, %s661
        %p663 = scmp.lt.s32.totalorder %s38, 1
        %s664 = scalar_select %p663, %s38, 1
        %s665 = smul.addr %s664, 8
        %s666 = scalar_lea.vmem %s1, %s665
        %v668 = vld [vmem:[%s662] sm:$0xff]
        %v669 = vpack.c.bf16 %v668, %v668
        %v670 = vld [vmem:[%s666] sm:$0xff]
        %v671 = vpack.c.bf16 %v670, %v670
        %v672 = vld [vmem:[%s2] sm:$0xf]
        %v673 = vld [vmem:[%s2 + $0x4] sm:$0xf]
        %v674 = vld [vmem:[%s2 + $0x8] sm:$0xf]
        %v675 = vld [vmem:[%s2 + $0xc] sm:$0xf]
        %v676 = vld [vmem:[%s3] sm:$0x1]
        %v678 = vperm.slane %v676, 0
        %v684 = vunpack.c.l.b16 %v672
        %v685 = vunpack.c.l.b16 %v673
        %v686 = vunpack.c.l.b16 %v674
        %v687 = vunpack.c.l.b16 %v675
        %v688 = vpack.c.b16 %v685, %v684
        %v689 = vpack.c.b16 %v687, %v686
        %vm692 = vcmask 261120
        %v694 = vsel %vm692, %v669, 0
        %696 = vmatpush.bf16.msra.mxu0 0
        %697 = vmatpush.bf16.msra.mxu0 0
        %698 = vmatpush.bf16.msra.mxu0 0
        %699 = vmatpush.bf16.msra.mxu0 0
        %700 = vmatpush.bf16.msra.mxu0 0
        %701 = vmatpush.bf16.msra.mxu0 0
        %702 = vmatpush.bf16.msra.mxu0 %v689
        %703 = vmatpush.bf16.msra.mxu0 %v688
        %704 = vmatmul.bf16.gmra.mxu0 %v694
        %v705 = vpop.f32.mrf.mxu0
        %v706 = vadd.f32 %v678, %v705
        %v707 = vpop.f32.mrf.mxu0
        %708 = vdwg.mxu0
        %v709 = vmul.f32 %v706, 0.35355338
        %v710 = vld [vmem:[%s4] sm:$0xf]
        %v711 = vld [vmem:[%s4 + $0x4] sm:$0xf]
        %v712 = vld [vmem:[%s4 + $0x8] sm:$0xf]
        %v713 = vld [vmem:[%s4 + $0xc] sm:$0xf]
        %v714 = vld [vmem:[%s5] sm:$0x1]
        %v716 = vperm.slane %v714, 0
        %v722 = vunpack.c.l.b16 %v710
        %v723 = vunpack.c.l.b16 %v711
        %v724 = vunpack.c.l.b16 %v712
        %v725 = vunpack.c.l.b16 %v713
        %v726 = vpack.c.b16 %v723, %v722
        %v727 = vpack.c.b16 %v725, %v724
        %v731 = vsel %vm692, %v671, 0
        %733 = vmatpush.bf16.msra.mxu0 0
        %734 = vmatpush.bf16.msra.mxu0 0
        %735 = vmatpush.bf16.msra.mxu0 0
        %736 = vmatpush.bf16.msra.mxu0 0
        %737 = vmatpush.bf16.msra.mxu0 0
        %738 = vmatpush.bf16.msra.mxu0 0
        %739 = vmatpush.bf16.msra.mxu0 %v727
        %740 = vmatpush.bf16.msra.mxu0 %v726
        %741 = vmatmul.bf16.gmra.mxu0 %v731
        %v742 = vpop.f32.mrf.mxu0
        %v743 = vadd.f32 %v716, %v742
        %v744 = vpop.f32.mrf.mxu0
        %745 = vdwg.mxu0
        %v746 = vld [vmem:[%s6] sm:$0xf]
        %v747 = vld [vmem:[%s6 + $0x4] sm:$0xf]
        %v748 = vld [vmem:[%s6 + $0x8] sm:$0xf]
        %v749 = vld [vmem:[%s6 + $0xc] sm:$0xf]
        %v750 = vld [vmem:[%s7] sm:$0x1]
        %v752 = vperm.slane %v750, 0
        %v758 = vunpack.c.l.b16 %v746
        %v759 = vunpack.c.l.b16 %v747
        %v760 = vunpack.c.l.b16 %v748
        %v761 = vunpack.c.l.b16 %v749
        %v762 = vpack.c.b16 %v759, %v758
        %v763 = vpack.c.b16 %v761, %v760
        %766 = vmatpush.bf16.msra.mxu0 0
        %767 = vmatpush.bf16.msra.mxu0 0
        %768 = vmatpush.bf16.msra.mxu0 0
        %769 = vmatpush.bf16.msra.mxu0 0
        %770 = vmatpush.bf16.msra.mxu0 0
        %771 = vmatpush.bf16.msra.mxu0 0
        %772 = vmatpush.bf16.msra.mxu0 %v763
        %773 = vmatpush.bf16.msra.mxu0 %v762
        %774 = vmatmul.bf16.gmra.mxu0 %v731
        %v775 = vpop.f32.mrf.mxu0
        %v776 = vadd.f32 %v752, %v775
        %v777 = vpop.f32.mrf.mxu0
        %778 = vdwg.mxu0
        %v779 = vpack.c.bf16 %v709, %v709
        %v780 = vpack.c.bf16 %v743, %v743
        %vm781 = vcmask 64512
        %v783 = vsel %vm781, %v779, 0
        %v786 = vsel %vm781, %v780, 0
        %788 = vmatpush.bf16.xpose.msra.mxu0 0
        %789 = vmatpush.bf16.xpose.msra.mxu0 0
        %790 = vmatpush.bf16.xpose.msra.mxu0 0
        %791 = vmatpush.bf16.xpose.msra.mxu0 0
        %792 = vmatpush.bf16.xpose.msra.mxu0 0
        %793 = vmatpush.bf16.xpose.msra.mxu0 0
        %794 = vmatpush.bf16.xpose.msra.mxu0 0
        %795 = vmatpush.bf16.xpose.msra.mxu0 %v786
        %796 = vmatmul.bf16.gmra.mxu0 %v783
        %v797 = vpop.f32.mrf.mxu0
        %v798 = vadd.f32 0.0, %v797
        %v799 = vpop.f32.mrf.mxu0
        %800 = vdwg.mxu0
        %v801 = vsel %vm781, %v798, -inf
        %802 = vmax.xlane.f32.xlu0 %v801
        %v803 = vpop.xlane.xlu0 %802
        %v804 = vsub.f32 %v798, %v803
        %v805 = vmul.f32 %v804, 1.442695
        %v806 = vpow.pop %v805
        %v807 = vsel %vm781, %v806, 0.0
        %808 = vadd.xlane.f32.xlu0 %v807
        %v809 = vpop.xlane.xlu0 %808
        %v810 = vrcp.pop %v809
        %v811 = vmul.f32 %v806, %v810
        %v812 = vpack.c.bf16 %v811, %v811
        %v813 = vpack.c.bf16 %v776, %v776
        %v815 = vsel %vm781, %v812, 0
        %vm817 = vcmask 1043456
        %v819 = vsel %vm817, %v813, 0
        %821 = vmatpush.bf16.msra.mxu0 0
        %822 = vmatpush.bf16.msra.mxu0 0
        %823 = vmatpush.bf16.msra.mxu0 0
        %824 = vmatpush.bf16.msra.mxu0 0
        %825 = vmatpush.bf16.msra.mxu0 0
        %826 = vmatpush.bf16.msra.mxu0 0
        %827 = vmatpush.bf16.msra.mxu0 0
        %828 = vmatpush.bf16.msra.mxu0 %v819
        %829 = vmatmul.bf16.gmra.mxu0 %v815
        %v830 = vpop.f32.mrf.mxu0
        %v831 = vadd.f32 0.0, %v830
        %v832 = vpop.f32.mrf.mxu0
        %833 = vdwg.mxu0
        %v834 = vpack.c.bf16 %v831, %v831
        %v835 = vld [vmem:[%s8] sm:$0xf]
        %s836 = scalar_lea.vmem %s2, 16
        %v837 = vld [vmem:[%s836] sm:$0xf]
        %v838 = vld [vmem:[%s836 + $0x4] sm:$0xf]
        %v839 = vld [vmem:[%s836 + $0x8] sm:$0xf]
        %v840 = vld [vmem:[%s836 + $0xc] sm:$0xf]
        %s841 = scalar_lea.vmem %s3, 1
        %v842 = vld [vmem:[%s841] sm:$0x1]
        %v844 = vperm.slane %v842, 0
        %v850 = vunpack.c.l.b16 %v837
        %v851 = vunpack.c.l.b16 %v838
        %v852 = vunpack.c.l.b16 %v839
        %v853 = vunpack.c.l.b16 %v840
        %v854 = vpack.c.b16 %v851, %v850
        %v855 = vpack.c.b16 %v853, %v852
        %858 = vmatpush.bf16.msra.mxu0 0
        %859 = vmatpush.bf16.msra.mxu0 0
        %860 = vmatpush.bf16.msra.mxu0 0
        %861 = vmatpush.bf16.msra.mxu0 0
        %862 = vmatpush.bf16.msra.mxu0 0
        %863 = vmatpush.bf16.msra.mxu0 0
        %864 = vmatpush.bf16.msra.mxu0 %v855
        %865 = vmatpush.bf16.msra.mxu0 %v854
        %866 = vmatmul.bf16.gmra.mxu0 %v694
        %v867 = vpop.f32.mrf.mxu0
        %v868 = vadd.f32 %v844, %v867
        %v869 = vpop.f32.mrf.mxu0
        %870 = vdwg.mxu0
        %v871 = vmul.f32 %v868, 0.35355338
        %s872 = scalar_lea.vmem %s4, 16
        %v873 = vld [vmem:[%s872] sm:$0xf]
        %v874 = vld [vmem:[%s872 + $0x4] sm:$0xf]
        %v875 = vld [vmem:[%s872 + $0x8] sm:$0xf]
        %v876 = vld [vmem:[%s872 + $0xc] sm:$0xf]
        %s877 = scalar_lea.vmem %s5, 1
        %v878 = vld [vmem:[%s877] sm:$0x1]
        %v880 = vperm.slane %v878, 0
        %v886 = vunpack.c.l.b16 %v873
        %v887 = vunpack.c.l.b16 %v874
        %v888 = vunpack.c.l.b16 %v875
        %v889 = vunpack.c.l.b16 %v876
        %v890 = vpack.c.b16 %v887, %v886
        %v891 = vpack.c.b16 %v889, %v888
        %894 = vmatpush.bf16.msra.mxu0 0
        %895 = vmatpush.bf16.msra.mxu0 0
        %896 = vmatpush.bf16.msra.mxu0 0
        %897 = vmatpush.bf16.msra.mxu0 0
        %898 = vmatpush.bf16.msra.mxu0 0
        %899 = vmatpush.bf16.msra.mxu0 0
        %900 = vmatpush.bf16.msra.mxu0 %v891
        %901 = vmatpush.bf16.msra.mxu0 %v890
        %902 = vmatmul.bf16.gmra.mxu0 %v731
        %v903 = vpop.f32.mrf.mxu0
        %v904 = vadd.f32 %v880, %v903
        %v905 = vpop.f32.mrf.mxu0
        %906 = vdwg.mxu0
        %s907 = scalar_lea.vmem %s6, 16
        %v908 = vld [vmem:[%s907] sm:$0xf]
        %v909 = vld [vmem:[%s907 + $0x4] sm:$0xf]
        %v910 = vld [vmem:[%s907 + $0x8] sm:$0xf]
        %v911 = vld [vmem:[%s907 + $0xc] sm:$0xf]
        %s912 = scalar_lea.vmem %s7, 1
        %v913 = vld [vmem:[%s912] sm:$0x1]
        %v915 = vperm.slane %v913, 0
        %v921 = vunpack.c.l.b16 %v908
        %v922 = vunpack.c.l.b16 %v909
        %v923 = vunpack.c.l.b16 %v910
        %v924 = vunpack.c.l.b16 %v911
        %v925 = vpack.c.b16 %v922, %v921
        %v926 = vpack.c.b16 %v924, %v923
        %929 = vmatpush.bf16.msra.mxu0 0
        %930 = vmatpush.bf16.msra.mxu0 0
        %931 = vmatpush.bf16.msra.mxu0 0
        %932 = vmatpush.bf16.msra.mxu0 0
        %933 = vmatpush.bf16.msra.mxu0 0
        %934 = vmatpush.bf16.msra.mxu0 0
        %935 = vmatpush.bf16.msra.mxu0 %v926
        %936 = vmatpush.bf16.msra.mxu0 %v925
        %937 = vmatmul.bf16.gmra.mxu0 %v731
        %v938 = vpop.f32.mrf.mxu0
        %v939 = vadd.f32 %v915, %v938
        %v940 = vpop.f32.mrf.mxu0
        %941 = vdwg.mxu0
        %v942 = vpack.c.bf16 %v871, %v871
        %v943 = vpack.c.bf16 %v904, %v904
        %v945 = vsel %vm781, %v942, 0
        %v948 = vsel %vm781, %v943, 0
        %950 = vmatpush.bf16.xpose.msra.mxu0 0
        %951 = vmatpush.bf16.xpose.msra.mxu0 0
        %952 = vmatpush.bf16.xpose.msra.mxu0 0
        %953 = vmatpush.bf16.xpose.msra.mxu0 0
        %954 = vmatpush.bf16.xpose.msra.mxu0 0
        %955 = vmatpush.bf16.xpose.msra.mxu0 0
        %956 = vmatpush.bf16.xpose.msra.mxu0 0
        %957 = vmatpush.bf16.xpose.msra.mxu0 %v948
        %958 = vmatmul.bf16.gmra.mxu0 %v945
        %v959 = vpop.f32.mrf.mxu0
        %v960 = vadd.f32 0.0, %v959
        %v961 = vpop.f32.mrf.mxu0
        %962 = vdwg.mxu0
        %v963 = vsel %vm781, %v960, -inf
        %964 = vmax.xlane.f32.xlu0 %v963
        %v965 = vpop.xlane.xlu0 %964
        %v966 = vsub.f32 %v960, %v965
        %v967 = vmul.f32 %v966, 1.442695
        %v968 = vpow.pop %v967
        %v969 = vsel %vm781, %v968, 0.0
        %970 = vadd.xlane.f32.xlu0 %v969
        %v971 = vpop.xlane.xlu0 %970
        %v972 = vrcp.pop %v971
        %v973 = vmul.f32 %v968, %v972
        %v974 = vpack.c.bf16 %v973, %v973
        %v975 = vpack.c.bf16 %v939, %v939
        %v977 = vsel %vm781, %v974, 0
        %v980 = vsel %vm817, %v975, 0
        %982 = vmatpush.bf16.msra.mxu0 0
        %983 = vmatpush.bf16.msra.mxu0 0
        %984 = vmatpush.bf16.msra.mxu0 0
        %985 = vmatpush.bf16.msra.mxu0 0
        %986 = vmatpush.bf16.msra.mxu0 0
        %987 = vmatpush.bf16.msra.mxu0 0
        %988 = vmatpush.bf16.msra.mxu0 0
        %989 = vmatpush.bf16.msra.mxu0 %v980
        %990 = vmatmul.bf16.gmra.mxu0 %v977
        %v991 = vpop.f32.mrf.mxu0
        %v992 = vadd.f32 0.0, %v991
        %v993 = vpop.f32.mrf.mxu0
        %994 = vdwg.mxu0
        %v995 = vpack.c.bf16 %v992, %v992
        %s996 = scalar_lea.vmem %s8, 4
        %v997 = vld [vmem:[%s996] sm:$0xf]
        %v999 = vsel %vm781, %v995, 0
        %v1002 = vsel %vm817, %v997, 0
        %1004 = vmatpush.bf16.msra.mxu0 0
        %1005 = vmatpush.bf16.msra.mxu0 0
        %1006 = vmatpush.bf16.msra.mxu0 0
        %1007 = vmatpush.bf16.msra.mxu0 0
        %1008 = vmatpush.bf16.msra.mxu0 0
        %1009 = vmatpush.bf16.msra.mxu0 0
        %1010 = vmatpush.bf16.msra.mxu0 0
        %1011 = vmatpush.bf16.msra.mxu0 %v1002
        %1012 = vmatmul.bf16.gmra.mxu0 %v999
        %v1013 = vpop.f32.mrf.mxu0
        %v1014 = vadd.f32 0.0, %v1013
        %v1015 = vpop.f32.mrf.mxu0
        %1016 = vdwg.mxu0
        %v1018 = vsel %vm781, %v834, 0
        %v1021 = vsel %vm817, %v835, 0
        %1023 = vmatpush.bf16.msra.mxu0 0
        %1024 = vmatpush.bf16.msra.mxu0 0
        %1025 = vmatpush.bf16.msra.mxu0 0
        %1026 = vmatpush.bf16.msra.mxu0 0
        %1027 = vmatpush.bf16.msra.mxu0 0
        %1028 = vmatpush.bf16.msra.mxu0 0
        %1029 = vmatpush.bf16.msra.mxu0 0
        %1030 = vmatpush.bf16.msra.mxu0 %v1021
        %1031 = vmatmul.bf16.gmra.mxu0 %v1018
        %v1032 = vpop.f32.mrf.mxu0
        %v1033 = vadd.f32 %v1014, %v1032
        %v1034 = vpop.f32.mrf.mxu0
        %1035 = vdwg.mxu0
        %s1036 = scalar_lea.vmem %s2, 32
        %v1037 = vld [vmem:[%s1036] sm:$0xf]
        %v1038 = vld [vmem:[%s1036 + $0x4] sm:$0xf]
        %v1039 = vld [vmem:[%s1036 + $0x8] sm:$0xf]
        %v1040 = vld [vmem:[%s1036 + $0xc] sm:$0xf]
        %s1041 = scalar_lea.vmem %s3, 2
        %v1042 = vld [vmem:[%s1041] sm:$0x1]
        %v1044 = vperm.slane %v1042, 0
        %v1050 = vunpack.c.l.b16 %v1037
        %v1051 = vunpack.c.l.b16 %v1038
        %v1052 = vunpack.c.l.b16 %v1039
        %v1053 = vunpack.c.l.b16 %v1040
        %v1054 = vpack.c.b16 %v1051, %v1050
        %v1055 = vpack.c.b16 %v1053, %v1052
        %1058 = vmatpush.bf16.msra.mxu0 0
        %1059 = vmatpush.bf16.msra.mxu0 0
        %1060 = vmatpush.bf16.msra.mxu0 0
        %1061 = vmatpush.bf16.msra.mxu0 0
        %1062 = vmatpush.bf16.msra.mxu0 0
        %1063 = vmatpush.bf16.msra.mxu0 0
        %1064 = vmatpush.bf16.msra.mxu0 %v1055
        %1065 = vmatpush.bf16.msra.mxu0 %v1054
        %1066 = vmatmul.bf16.gmra.mxu0 %v694
        %v1067 = vpop.f32.mrf.mxu0
        %v1068 = vadd.f32 %v1044, %v1067
        %v1069 = vpop.f32.mrf.mxu0
        %1070 = vdwg.mxu0
        %v1071 = vmul.f32 %v1068, 0.35355338
        %s1072 = scalar_lea.vmem %s4, 32
        %v1073 = vld [vmem:[%s1072] sm:$0xf]
        %v1074 = vld [vmem:[%s1072 + $0x4] sm:$0xf]
        %v1075 = vld [vmem:[%s1072 + $0x8] sm:$0xf]
        %v1076 = vld [vmem:[%s1072 + $0xc] sm:$0xf]
        %s1077 = scalar_lea.vmem %s5, 2
        %v1078 = vld [vmem:[%s1077] sm:$0x1]
        %v1080 = vperm.slane %v1078, 0
        %v1086 = vunpack.c.l.b16 %v1073
        %v1087 = vunpack.c.l.b16 %v1074
        %v1088 = vunpack.c.l.b16 %v1075
        %v1089 = vunpack.c.l.b16 %v1076
        %v1090 = vpack.c.b16 %v1087, %v1086
        %v1091 = vpack.c.b16 %v1089, %v1088
        %1094 = vmatpush.bf16.msra.mxu0 0
        %1095 = vmatpush.bf16.msra.mxu0 0
        %1096 = vmatpush.bf16.msra.mxu0 0
        %1097 = vmatpush.bf16.msra.mxu0 0
        %1098 = vmatpush.bf16.msra.mxu0 0
        %1099 = vmatpush.bf16.msra.mxu0 0
        %1100 = vmatpush.bf16.msra.mxu0 %v1091
        %1101 = vmatpush.bf16.msra.mxu0 %v1090
        %1102 = vmatmul.bf16.gmra.mxu0 %v731
        %v1103 = vpop.f32.mrf.mxu0
        %v1104 = vadd.f32 %v1080, %v1103
        %v1105 = vpop.f32.mrf.mxu0
        %1106 = vdwg.mxu0
        %s1107 = scalar_lea.vmem %s6, 32
        %v1108 = vld [vmem:[%s1107] sm:$0xf]
        %v1109 = vld [vmem:[%s1107 + $0x4] sm:$0xf]
        %v1110 = vld [vmem:[%s1107 + $0x8] sm:$0xf]
        %v1111 = vld [vmem:[%s1107 + $0xc] sm:$0xf]
        %s1112 = scalar_lea.vmem %s7, 2
        %v1113 = vld [vmem:[%s1112] sm:$0x1]
        %v1115 = vperm.slane %v1113, 0
        %v1121 = vunpack.c.l.b16 %v1108
        %v1122 = vunpack.c.l.b16 %v1109
        %v1123 = vunpack.c.l.b16 %v1110
        %v1124 = vunpack.c.l.b16 %v1111
        %v1125 = vpack.c.b16 %v1122, %v1121
        %v1126 = vpack.c.b16 %v1124, %v1123
        %1129 = vmatpush.bf16.msra.mxu0 0
        %1130 = vmatpush.bf16.msra.mxu0 0
        %1131 = vmatpush.bf16.msra.mxu0 0
        %1132 = vmatpush.bf16.msra.mxu0 0
        %1133 = vmatpush.bf16.msra.mxu0 0
        %1134 = vmatpush.bf16.msra.mxu0 0
        %1135 = vmatpush.bf16.msra.mxu0 %v1126
        %1136 = vmatpush.bf16.msra.mxu0 %v1125
        %1137 = vmatmul.bf16.gmra.mxu0 %v731
        %v1138 = vpop.f32.mrf.mxu0
        %v1139 = vadd.f32 %v1115, %v1138
        %v1140 = vpop.f32.mrf.mxu0
        %1141 = vdwg.mxu0
        %v1142 = vpack.c.bf16 %v1071, %v1071
        %v1143 = vpack.c.bf16 %v1104, %v1104
        %v1145 = vsel %vm781, %v1142, 0
        %v1148 = vsel %vm781, %v1143, 0
        %1150 = vmatpush.bf16.xpose.msra.mxu0 0
        %1151 = vmatpush.bf16.xpose.msra.mxu0 0
        %1152 = vmatpush.bf16.xpose.msra.mxu0 0
        %1153 = vmatpush.bf16.xpose.msra.mxu0 0
        %1154 = vmatpush.bf16.xpose.msra.mxu0 0
        %1155 = vmatpush.bf16.xpose.msra.mxu0 0
        %1156 = vmatpush.bf16.xpose.msra.mxu0 0
        %1157 = vmatpush.bf16.xpose.msra.mxu0 %v1148
        %1158 = vmatmul.bf16.gmra.mxu0 %v1145
        %v1159 = vpop.f32.mrf.mxu0
        %v1160 = vadd.f32 0.0, %v1159
        %v1161 = vpop.f32.mrf.mxu0
        %1162 = vdwg.mxu0
        %v1163 = vsel %vm781, %v1160, -inf
        %1164 = vmax.xlane.f32.xlu0 %v1163
        %v1165 = vpop.xlane.xlu0 %1164
        %v1166 = vsub.f32 %v1160, %v1165
        %v1167 = vmul.f32 %v1166, 1.442695
        %v1168 = vpow.pop %v1167
        %v1169 = vsel %vm781, %v1168, 0.0
        %1170 = vadd.xlane.f32.xlu0 %v1169
        %v1171 = vpop.xlane.xlu0 %1170
        %v1172 = vrcp.pop %v1171
        %v1173 = vmul.f32 %v1168, %v1172
        %v1174 = vpack.c.bf16 %v1173, %v1173
        %v1175 = vpack.c.bf16 %v1139, %v1139
        %v1177 = vsel %vm781, %v1174, 0
        %v1180 = vsel %vm817, %v1175, 0
        %1182 = vmatpush.bf16.msra.mxu0 0
        %1183 = vmatpush.bf16.msra.mxu0 0
        %1184 = vmatpush.bf16.msra.mxu0 0
        %1185 = vmatpush.bf16.msra.mxu0 0
        %1186 = vmatpush.bf16.msra.mxu0 0
        %1187 = vmatpush.bf16.msra.mxu0 0
        %1188 = vmatpush.bf16.msra.mxu0 0
        %1189 = vmatpush.bf16.msra.mxu0 %v1180
        %1190 = vmatmul.bf16.gmra.mxu0 %v1177
        %v1191 = vpop.f32.mrf.mxu0
        %v1192 = vadd.f32 0.0, %v1191
        %v1193 = vpop.f32.mrf.mxu0
        %1194 = vdwg.mxu0
        %v1195 = vpack.c.bf16 %v1192, %v1192
        %s1196 = scalar_lea.vmem %s8, 8
        %v1197 = vld [vmem:[%s1196] sm:$0xf]
        %v1199 = vsel %vm781, %v1195, 0
        %v1202 = vsel %vm817, %v1197, 0
        %1204 = vmatpush.bf16.msra.mxu0 0
        %1205 = vmatpush.bf16.msra.mxu0 0
        %1206 = vmatpush.bf16.msra.mxu0 0
        %1207 = vmatpush.bf16.msra.mxu0 0
        %1208 = vmatpush.bf16.msra.mxu0 0
        %1209 = vmatpush.bf16.msra.mxu0 0
        %1210 = vmatpush.bf16.msra.mxu0 0
        %1211 = vmatpush.bf16.msra.mxu0 %v1202
        %1212 = vmatmul.bf16.gmra.mxu0 %v1199
        %v1213 = vpop.f32.mrf.mxu0
        %v1214 = vadd.f32 0.0, %v1213
        %v1215 = vpop.f32.mrf.mxu0
        %1216 = vdwg.mxu0
        %v1217 = vadd.f32 %v1033, %v1214
        %s1218 = scalar_lea.vmem %s2, 48
        %v1219 = vld [vmem:[%s1218] sm:$0xf]
        %v1220 = vld [vmem:[%s1218 + $0x4] sm:$0xf]
        %v1221 = vld [vmem:[%s1218 + $0x8] sm:$0xf]
        %v1222 = vld [vmem:[%s1218 + $0xc] sm:$0xf]
        %s1223 = scalar_lea.vmem %s3, 3
        %v1224 = vld [vmem:[%s1223] sm:$0x1]
        %v1226 = vperm.slane %v1224, 0
        %v1232 = vunpack.c.l.b16 %v1219
        %v1233 = vunpack.c.l.b16 %v1220
        %v1234 = vunpack.c.l.b16 %v1221
        %v1235 = vunpack.c.l.b16 %v1222
        %v1236 = vpack.c.b16 %v1233, %v1232
        %v1237 = vpack.c.b16 %v1235, %v1234
        %1240 = vmatpush.bf16.msra.mxu0 0
        %1241 = vmatpush.bf16.msra.mxu0 0
        %1242 = vmatpush.bf16.msra.mxu0 0
        %1243 = vmatpush.bf16.msra.mxu0 0
        %1244 = vmatpush.bf16.msra.mxu0 0
        %1245 = vmatpush.bf16.msra.mxu0 0
        %1246 = vmatpush.bf16.msra.mxu0 %v1237
        %1247 = vmatpush.bf16.msra.mxu0 %v1236
        %1248 = vmatmul.bf16.gmra.mxu0 %v694
        %v1249 = vpop.f32.mrf.mxu0
        %v1250 = vadd.f32 %v1226, %v1249
        %v1251 = vpop.f32.mrf.mxu0
        %1252 = vdwg.mxu0
        %v1253 = vmul.f32 %v1250, 0.35355338
        %s1254 = scalar_lea.vmem %s4, 48
        %v1255 = vld [vmem:[%s1254] sm:$0xf]
        %v1256 = vld [vmem:[%s1254 + $0x4] sm:$0xf]
        %v1257 = vld [vmem:[%s1254 + $0x8] sm:$0xf]
        %v1258 = vld [vmem:[%s1254 + $0xc] sm:$0xf]
        %s1259 = scalar_lea.vmem %s5, 3
        %v1260 = vld [vmem:[%s1259] sm:$0x1]
        %v1262 = vperm.slane %v1260, 0
        %v1268 = vunpack.c.l.b16 %v1255
        %v1269 = vunpack.c.l.b16 %v1256
        %v1270 = vunpack.c.l.b16 %v1257
        %v1271 = vunpack.c.l.b16 %v1258
        %v1272 = vpack.c.b16 %v1269, %v1268
        %v1273 = vpack.c.b16 %v1271, %v1270
        %1276 = vmatpush.bf16.msra.mxu0 0
        %1277 = vmatpush.bf16.msra.mxu0 0
        %1278 = vmatpush.bf16.msra.mxu0 0
        %1279 = vmatpush.bf16.msra.mxu0 0
        %1280 = vmatpush.bf16.msra.mxu0 0
        %1281 = vmatpush.bf16.msra.mxu0 0
        %1282 = vmatpush.bf16.msra.mxu0 %v1273
        %1283 = vmatpush.bf16.msra.mxu0 %v1272
        %1284 = vmatmul.bf16.gmra.mxu0 %v731
        %v1285 = vpop.f32.mrf.mxu0
        %v1286 = vadd.f32 %v1262, %v1285
        %v1287 = vpop.f32.mrf.mxu0
        %1288 = vdwg.mxu0
        %s1289 = scalar_lea.vmem %s6, 48
        %v1290 = vld [vmem:[%s1289] sm:$0xf]
        %v1291 = vld [vmem:[%s1289 + $0x4] sm:$0xf]
        %v1292 = vld [vmem:[%s1289 + $0x8] sm:$0xf]
        %v1293 = vld [vmem:[%s1289 + $0xc] sm:$0xf]
        %s1294 = scalar_lea.vmem %s7, 3
        %v1295 = vld [vmem:[%s1294] sm:$0x1]
        %v1297 = vperm.slane %v1295, 0
        %v1303 = vunpack.c.l.b16 %v1290
        %v1304 = vunpack.c.l.b16 %v1291
        %v1305 = vunpack.c.l.b16 %v1292
        %v1306 = vunpack.c.l.b16 %v1293
        %v1307 = vpack.c.b16 %v1304, %v1303
        %v1308 = vpack.c.b16 %v1306, %v1305
        %1311 = vmatpush.bf16.msra.mxu0 0
        %1312 = vmatpush.bf16.msra.mxu0 0
        %1313 = vmatpush.bf16.msra.mxu0 0
        %1314 = vmatpush.bf16.msra.mxu0 0
        %1315 = vmatpush.bf16.msra.mxu0 0
        %1316 = vmatpush.bf16.msra.mxu0 0
        %1317 = vmatpush.bf16.msra.mxu0 %v1308
        %1318 = vmatpush.bf16.msra.mxu0 %v1307
        %1319 = vmatmul.bf16.gmra.mxu0 %v731
        %v1320 = vpop.f32.mrf.mxu0
        %v1321 = vadd.f32 %v1297, %v1320
        %v1322 = vpop.f32.mrf.mxu0
        %1323 = vdwg.mxu0
        %v1324 = vpack.c.bf16 %v1253, %v1253
        %v1325 = vpack.c.bf16 %v1286, %v1286
        %v1327 = vsel %vm781, %v1324, 0
        %v1330 = vsel %vm781, %v1325, 0
        %1332 = vmatpush.bf16.xpose.msra.mxu0 0
        %1333 = vmatpush.bf16.xpose.msra.mxu0 0
        %1334 = vmatpush.bf16.xpose.msra.mxu0 0
        %1335 = vmatpush.bf16.xpose.msra.mxu0 0
        %1336 = vmatpush.bf16.xpose.msra.mxu0 0
        %1337 = vmatpush.bf16.xpose.msra.mxu0 0
        %1338 = vmatpush.bf16.xpose.msra.mxu0 0
        %1339 = vmatpush.bf16.xpose.msra.mxu0 %v1330
        %1340 = vmatmul.bf16.gmra.mxu0 %v1327
        %v1341 = vpop.f32.mrf.mxu0
        %v1342 = vadd.f32 0.0, %v1341
        %v1343 = vpop.f32.mrf.mxu0
        %1344 = vdwg.mxu0
        %v1345 = vsel %vm781, %v1342, -inf
        %1346 = vmax.xlane.f32.xlu0 %v1345
        %v1347 = vpop.xlane.xlu0 %1346
        %v1348 = vsub.f32 %v1342, %v1347
        %v1349 = vmul.f32 %v1348, 1.442695
        %v1350 = vpow.pop %v1349
        %v1351 = vsel %vm781, %v1350, 0.0
        %1352 = vadd.xlane.f32.xlu0 %v1351
        %v1353 = vpop.xlane.xlu0 %1352
        %v1354 = vrcp.pop %v1353
        %v1355 = vmul.f32 %v1350, %v1354
        %v1356 = vpack.c.bf16 %v1355, %v1355
        %v1357 = vpack.c.bf16 %v1321, %v1321
        %v1359 = vsel %vm781, %v1356, 0
        %v1362 = vsel %vm817, %v1357, 0
        %1364 = vmatpush.bf16.msra.mxu0 0
        %1365 = vmatpush.bf16.msra.mxu0 0
        %1366 = vmatpush.bf16.msra.mxu0 0
        %1367 = vmatpush.bf16.msra.mxu0 0
        %1368 = vmatpush.bf16.msra.mxu0 0
        %1369 = vmatpush.bf16.msra.mxu0 0
        %1370 = vmatpush.bf16.msra.mxu0 0
        %1371 = vmatpush.bf16.msra.mxu0 %v1362
        %1372 = vmatmul.bf16.gmra.mxu0 %v1359
        %v1373 = vpop.f32.mrf.mxu0
        %v1374 = vadd.f32 0.0, %v1373
        %v1375 = vpop.f32.mrf.mxu0
        %1376 = vdwg.mxu0
        %v1377 = vpack.c.bf16 %v1374, %v1374
        %s1378 = scalar_lea.vmem %s8, 12
        %v1379 = vld [vmem:[%s1378] sm:$0xf]
        %v1381 = vsel %vm781, %v1377, 0
        %v1384 = vsel %vm817, %v1379, 0
        %1386 = vmatpush.bf16.msra.mxu0 0
        %1387 = vmatpush.bf16.msra.mxu0 0
        %1388 = vmatpush.bf16.msra.mxu0 0
        %1389 = vmatpush.bf16.msra.mxu0 0
        %1390 = vmatpush.bf16.msra.mxu0 0
        %1391 = vmatpush.bf16.msra.mxu0 0
        %1392 = vmatpush.bf16.msra.mxu0 0
        %1393 = vmatpush.bf16.msra.mxu0 %v1384
        %1394 = vmatmul.bf16.gmra.mxu0 %v1381
        %v1395 = vpop.f32.mrf.mxu0
        %v1396 = vadd.f32 0.0, %v1395
        %v1397 = vpop.f32.mrf.mxu0
        %1398 = vdwg.mxu0
        %v1399 = vadd.f32 %v1217, %v1396
        %v1400 = vld [vmem:[%s9] sm:$0x1]
        %v1402 = vperm.slane %v1400, 0
        %v1404 = vadd.f32 %v1399, %v1402
        %v1405 = vadd.f32 %v1404, %v668
        %v1406 = vsel %vm692, %v1405, 0.0
        %1407 = vadd.xlane.f32.xlu0 %v1406
        %v1408 = vpop.xlane.xlu0 %1407
        %v1409 = vrcp.pop 32.0
        %v1410 = vmul.f32 32.0, %v1409
        %v1411 = vsub.f32 1.0, %v1410
        %v1412 = vmul.f32 %v1409, %v1411
        %v1413 = vadd.f32 %v1409, %v1412
        %vm1414 = vweird.f32 %v1409
        %v1415 = vsel %vm1414, %v1409, %v1413
        %v1416 = vmul.f32 %v1408, %v1415
        %v1417 = vsub.f32 %v1405, %v1416
        %v1418 = vmul.f32 %v1417, %v1417
        %v1419 = vsel %vm692, %v1418, 0.0
        %1420 = vadd.xlane.f32.xlu0 %v1419
        %v1421 = vpop.xlane.xlu0 %1420
        %v1422 = vmul.f32 %v1421, %v1415
        %v1423 = vadd.f32 %v1422, 1e-05
        %v1424 = vrsqrt.pop %v1423
        %v1425 = vmul.f32 %v1424, %v1423
        %v1426 = vmul.f32 %v1425, %v1424
        %v1427 = vmul.f32 0.5, %v1426
        %v1428 = vsub.f32 1.5, %v1427
        %v1429 = vmul.f32 %v1424, %v1428
        %vm1430 = vweird.f32 %v1423
        %vm1431 = vweird.f32 %v1424
        %vm1432 = vmor %vm1430, %vm1431
        %v1433 = vsel %vm1432, %v1424, %v1429
        %v1434 = vmul.f32 %v1417, %v1433
        %v1435 = vld [vmem:[%s10] sm:$0x1]
        %v1437 = vperm.slane %v1435, 0
        %v1439 = vmul.f32 %v1434, %v1437
        %v1440 = vld [vmem:[%s11] sm:$0x1]
        %v1442 = vperm.slane %v1440, 0
        %v1444 = vadd.f32 %v1439, %v1442
        %v1445 = vpack.c.bf16 %v1444, %v1444
        %v1446 = vld [vmem:[%s12] sm:$0xf]
        %v1447 = vld [vmem:[%s12 + $0x4] sm:$0xf]
        %v1448 = vld [vmem:[%s12 + $0x8] sm:$0xf]
        %v1449 = vld [vmem:[%s12 + $0xc] sm:$0xf]
        %v1450 = vld [vmem:[%s13] sm:$0x1]
        %v1452 = vperm.slane %v1450, 0
        %v1458 = vunpack.c.l.b16 %v1446
        %v1459 = vunpack.c.l.b16 %v1447
        %v1460 = vunpack.c.l.b16 %v1448
        %v1461 = vunpack.c.l.b16 %v1449
        %v1462 = vpack.c.b16 %v1459, %v1458
        %v1463 = vpack.c.b16 %v1461, %v1460
        %v1467 = vsel %vm692, %v1445, 0
        %1469 = vmatpush.bf16.msra.mxu0 0
        %1470 = vmatpush.bf16.msra.mxu0 0
        %1471 = vmatpush.bf16.msra.mxu0 0
        %1472 = vmatpush.bf16.msra.mxu0 0
        %1473 = vmatpush.bf16.msra.mxu0 0
        %1474 = vmatpush.bf16.msra.mxu0 0
        %1475 = vmatpush.bf16.msra.mxu0 %v1463
        %1476 = vmatpush.bf16.msra.mxu0 %v1462
        %1477 = vmatmul.bf16.gmra.mxu0 %v1467
        %v1478 = vpop.f32.mrf.mxu0
        %v1479 = vadd.f32 %v1452, %v1478
        %v1480 = vpop.f32.mrf.mxu0
        %1481 = vdwg.mxu0
        %v1482 = vmax.f32 %v1479, 0.0
        %v1483 = vpack.c.bf16 %v1482, %v1482
        %v1484 = vld [vmem:[%s14] sm:$0xf]
        %v1485 = vld [vmem:[%s14 + $0x4] sm:$0xf]
        %v1486 = vld [vmem:[%s14 + $0x8] sm:$0xf]
        %v1487 = vld [vmem:[%s14 + $0xc] sm:$0xf]
        %v1488 = vld [vmem:[%s14 + $0x10] sm:$0xf]
        %v1489 = vld [vmem:[%s14 + $0x14] sm:$0xf]
        %v1490 = vld [vmem:[%s14 + $0x18] sm:$0xf]
        %v1491 = vld [vmem:[%s14 + $0x1c] sm:$0xf]
        %v1492 = vld [vmem:[%s15] sm:$0x1]
        %v1494 = vperm.slane %v1492, 0
        %v1504 = vunpack.c.l.b16 %v1484
        %v1505 = vunpack.c.l.b16 %v1485
        %v1506 = vunpack.c.l.b16 %v1486
        %v1507 = vunpack.c.l.b16 %v1487
        %v1508 = vunpack.c.l.b16 %v1488
        %v1509 = vunpack.c.l.b16 %v1489
        %v1510 = vunpack.c.l.b16 %v1490
        %v1511 = vunpack.c.l.b16 %v1491
        %v1512 = vpack.c.b16 %v1505, %v1504
        %v1513 = vpack.c.b16 %v1507, %v1506
        %v1514 = vpack.c.b16 %v1509, %v1508
        %v1515 = vpack.c.b16 %v1511, %v1510
        %vm1520 = vcmask 523264
        %v1522 = vsel %vm1520, %v1483, 0
        %1524 = vmatpush.bf16.msra.mxu0 0
        %1525 = vmatpush.bf16.msra.mxu0 0
        %1526 = vmatpush.bf16.msra.mxu0 0
        %1527 = vmatpush.bf16.msra.mxu0 0
        %1528 = vmatpush.bf16.msra.mxu0 %v1515
        %1529 = vmatpush.bf16.msra.mxu0 %v1514
        %1530 = vmatpush.bf16.msra.mxu0 %v1513
        %1531 = vmatpush.bf16.msra.mxu0 %v1512
        %1532 = vmatmul.bf16.gmra.mxu0 %v1522
        %v1533 = vpop.f32.mrf.mxu0
        %v1534 = vadd.f32 %v1494, %v1533
        %v1535 = vpop.f32.mrf.mxu0
        %1536 = vdwg.mxu0
        %v1537 = vld [vmem:[%s16] sm:$0xf]
        %v1538 = vld [vmem:[%s16 + $0x4] sm:$0xf]
        %v1539 = vld [vmem:[%s16 + $0x8] sm:$0xf]
        %v1540 = vld [vmem:[%s16 + $0xc] sm:$0xf]
        %v1541 = vld [vmem:[%s17] sm:$0x1]
        %v1543 = vperm.slane %v1541, 0
        %v1549 = vunpack.c.l.b16 %v1537
        %v1550 = vunpack.c.l.b16 %v1538
        %v1551 = vunpack.c.l.b16 %v1539
        %v1552 = vunpack.c.l.b16 %v1540
        %v1553 = vpack.c.b16 %v1550, %v1549
        %v1554 = vpack.c.b16 %v1552, %v1551
        %1557 = vmatpush.bf16.msra.mxu0 0
        %1558 = vmatpush.bf16.msra.mxu0 0
        %1559 = vmatpush.bf16.msra.mxu0 0
        %1560 = vmatpush.bf16.msra.mxu0 0
        %1561 = vmatpush.bf16.msra.mxu0 0
        %1562 = vmatpush.bf16.msra.mxu0 0
        %1563 = vmatpush.bf16.msra.mxu0 %v1554
        %1564 = vmatpush.bf16.msra.mxu0 %v1553
        %1565 = vmatmul.bf16.gmra.mxu0 %v1467
        %v1566 = vpop.f32.mrf.mxu0
        %v1567 = vadd.f32 %v1543, %v1566
        %v1568 = vpop.f32.mrf.mxu0
        %1569 = vdwg.mxu0
        %v1570 = vadd.f32 %v1534, %v1567
        %v1571 = vlaneseq
        %v1572 = vand.u32 %v1571, 127
        %vm1573 = vcmp.lt.s32.totalorder %v1572, 48
        %v1574 = vsel %vm1573, 1, 0
        %v1575 = vcvt.s32.f32 %v1574
        %1576 = vadd.xlane.f32.xlu0 %v1570
        %v1577 = vpop.xlane.xlu0 %1576
        %v1578 = vmul.f32 %v1577, 0.020833334
        %v1579 = vsub.f32 %v1570, %v1578
        %v1580 = vmul.f32 %v1579, %v1575
        %v1581 = vmul.f32 %v1580, %v1580
        %1582 = vadd.xlane.f32.xlu0 %v1581
        %v1583 = vpop.xlane.xlu0 %1582
        %v1584 = vmul.f32 %v1583, 0.020833334
        %v1585 = vadd.f32 %v1584, 1e-05
        %v1586 = vrsqrt.pop %v1585
        %v1587 = vmul.f32 %v1586, %v1585
        %v1588 = vmul.f32 %v1587, %v1586
        %v1589 = vmul.f32 0.5, %v1588
        %v1590 = vsub.f32 1.5, %v1589
        %v1591 = vmul.f32 %v1586, %v1590
        %vm1592 = vweird.f32 %v1585
        %vm1593 = vweird.f32 %v1586
        %vm1594 = vmor %vm1592, %vm1593
        %v1595 = vsel %vm1594, %v1586, %v1591
        %v1596 = vmul.f32 %v1580, %v1595
        %v1597 = vld [vmem:[%s18] sm:$0x1]
        %v1599 = vperm.slane %v1597, 0
        %v1601 = vmul.f32 %v1596, %v1599
        %v1602 = vld [vmem:[%s19] sm:$0x1]
        %v1604 = vperm.slane %v1602, 0
        %v1606 = vadd.f32 %v1601, %v1604
        %1607 = vst [vmem:[%s655] sm:$0xff] %v1606
        %s1608 = sand.u32 %s488, 1
        %s1609 = scalar_lea.sflag [#allocation3], %s1608
        %s1610 = sand.u32 %s488, 1
        %s1611 = smul.addr %s1610, 8
        %s1612 = scalar_lea.vmem [#allocation2], %s1611
        // Predicated region
        $region101: #{scaling_layer_forward.1} parent=99 // pred_check
          %p1613 = pneg %p498
        $region102: #{scaling_layer_forward.1} parent=99 // pred_check_branch
          %1615 = sbr.rel (%p1613) target = $region104
        $region103: #{scaling_layer_forward.1} parent=99 // pred_region
          %1617 = vsyncadd %s1609, 0
          %s1618 = sadd.s32 %s39, %s38
          %s1619 = smul.addr %s1618, 8
          %s1620 = scalar_lea.hbm %s20, %s1619
          %s1622 = sshll.u32 %s1612, 4
          %s1623 = int_to_ptr.vmem [resolvable:$true] %s1622
          %s1624 = sshll.u32 %s1620, 4
          %s1625 = int_to_ptr.hbm [resolvable:$true] %s1624
          %1627 = dma.vmem_to_hbm [thread:$0]  %s1623, 128, %s1625, %s1609
        $region104: #{scaling_layer_forward.1} parent=99 // pred_fallthru
          _
      $region100: #{scaling_layer_forward.1} parent=5 // pred_fallthru
        _
      %p1628 = scmp.le.s32.totalorder 2, %s29
      // Predicated region
      $region105: #{scaling_layer_forward.1} parent=5 // pred_check
        %p1629 = pneg %p1628
      $region106: #{scaling_layer_forward.1} parent=5 // pred_check_branch
        %1631 = sbr.rel (%p1629) target = $region108
      $region107: #{scaling_layer_forward.1} parent=5 // pred_region
        %s1632 = ssub.s32 %s29, 2
        // Predicated region
        $region109: #{scaling_layer_forward.1} parent=107 // pred_check
          %p1633 = pneg %p504
        $region110: #{scaling_layer_forward.1} parent=107 // pred_check_branch
          %1635 = sbr.rel (%p1633) target = $region112
        $region111: #{scaling_layer_forward.1} parent=107 // pred_region
          %s1636 = sand.u32 %s489, 1
          %s1637 = scalar_lea.sflag [#allocation3], %s1636
          %s1638 = sand.u32 %s489, 1
          %s1639 = smul.addr %s1638, 8
          %s1640 = scalar_lea.vmem [#allocation2], %s1639
          %1642 = dma.done %s1637, 128
        $region112: #{scaling_layer_forward.1} parent=107 // pred_fallthru
          _
      $region108: #{scaling_layer_forward.1} parent=5 // pred_fallthru
        _
    $region6: #{scaling_layer_forward.1} parent=1 // loop_footer
      %s33 = sadd.s32 1, %s29
    $region7: #{scaling_layer_forward.1} parent=1 // loop_footer_branch
      %28 = sbr.rel target = $region3
    $region8: #{scaling_layer_forward.1} parent=1 // loop_exit
      _
    %1643 = vsyncpa [#allocation3], 1
    %s1644 = scalar_lea.sflag [#allocation3], 1
    %1645 = vsyncpa %s1644, 1

</llo_original>
